<compile_context>
chip_gen: v7x
topology: tpu7x:2x2x1
jax: 0.10.0
libtpu: 0.0.40
codegen_flags: <defaults>
</compile_context>

<pallas_src>
import functools

import jax
import jax.numpy as jnp
from jax.experimental import pallas as pl
from jax.experimental.pallas import tpu as pltpu


def _round_up(x, m):
    return ((x + m - 1) // m) * m


def _cdiv(a, b):
    return (a + b - 1) // b


# ----------------------------------------------------------------------------
# Fused kernel: the full TCN stack for TB batch elements per grid step
# ----------------------------------------------------------------------------
def _tcn_stack_kernel(x_ref, w1_ref, b1_ref, w2_ref, b2_ref, *rest,
                      k, dilations, ds_map, Lp, pref, C, TB, cdtype):
    # x_ref   : (TB, pref+Lp, C) time+channel padded input (compute dtype,
    #                            zero causal prefix already included)
    # w1_ref  : (nL, k*C, C)     conv1 weights, taps stacked on contraction
    # b1_ref  : (nL, 1, C)       conv1 bias (f32)
    # w2_ref  : (nL, k*C, C)     conv2 weights
    # b2_ref  : (nL, 1, C)       conv2 bias (f32)
    # [wres_ref: (n_ds, C, C), bres_ref: (n_ds, 1, C)]  only if any downsample
    # out_ref : (TB, Lp, C)      last-layer output (compute dtype)
    # cur,tmp : (TB, pref+Lp, C) VMEM activation buffers (zero causal prefix)
    # taps    : (TB, Lp, k*C)    reusable conv-operand scratch
    n_layers = len(dilations)
    has_ds = any(m is not None for m in ds_map)
    if has_ds:
        wres_ref, bres_ref, out_ref, cur, tmp, taps = rest
    else:
        out_ref, cur, tmp, taps = rest

    M = TB * Lp
    kC = k * C

    # The causal prefix of the ping-pong buffers must be zero.  It is tiny
    # (pref rows per buffer) and is re-zeroed per grid step so the kernel is
    # megacore-safe (a core may never execute grid step 0); the activation
    # rows [pref, pref+Lp) are always fully rewritten below.
    if pref > 0:
        z = jnp.zeros((TB, pref, C), cdtype)
        cur[:, 0:pref, :] = z
        tmp[:, 0:pref, :] = z

    def load_taps(src, d):
        # Write the k dilated, causally-shifted views into the reusable taps
        # scratch (lane-aligned destinations) and return the (M, k*C) operand
        # for a single big-K MXU matmul.
        for j in range(k):
            off = pref - (k - 1 - j) * d      # >= 0; zeros live below `pref`
            taps[:, :, j * C:(j + 1) * C] = src[:, off:off + Lp, :]
        return taps[...].reshape(M, kC)

    src = x_ref
    y = None
    for i in range(n_layers):                 # static unroll over layers
        d = dilations[i]

        # conv1 -> bias -> relu   (dropout = identity at inference)
        a1 = jnp.dot(load_taps(src, d), w1_ref[i],
                     preferred_element_type=jnp.float32)
        o1 = jnp.maximum(a1 + b1_ref[i], 0.0)
        tmp[:, pref:pref + Lp, :] = o1.reshape(TB, Lp, C).astype(cdtype)

        # conv2 -> bias -> relu
        a2 = jnp.dot(load_taps(tmp, d), w2_ref[i],
                     preferred_element_type=jnp.float32)
        o2 = jnp.maximum(a2 + b2_ref[i], 0.0)

        # residual branch (1x1 downsample conv only where Cin != Cout)
        x_in = src[:, pref:pref + Lp, :].reshape(M, C)
        if ds_map[i] is not None:
            res = jnp.dot(x_in, wres_ref[ds_map[i]],
                          preferred_element_type=jnp.float32) + bres_ref[ds_map[i]]
        else:
            res = x_in.astype(jnp.float32)

        y = jnp.maximum(o2 + res, 0.0)
        if i < n_layers - 1:
            cur[:, pref:pref + Lp, :] = y.reshape(TB, Lp, C).astype(cdtype)
            src = cur

    out_ref[...] = y.reshape(TB, Lp, C).astype(out_ref.dtype)


# ----------------------------------------------------------------------------
# Parameter packing: torch-layout params -> lane-dense stacked kernel layout
# ----------------------------------------------------------------------------
def _pack_conv(w, b, C, cdtype):
    # torch conv1d weight (Cout, Cin, k) -> (k*C, C) with taps stacked on the
    # contraction axis (row = j*C + cin), zero padded to lane-dense C.
    cout, cin, k = w.shape
    wt = jnp.transpose(w, (2, 1, 0))                        # (k, Cin, Cout)
    wt = jnp.pad(wt, ((0, 0), (0, C - cin), (0, C - cout)))
    wcat = wt.reshape(k * C, C).astype(cdtype)
    bp = jnp.pad(b, (0, C - cout)).reshape(1, C).astype(jnp.float32)
    return wcat, bp


def _pack_tcn_params(params, kernel_size, compute_dtype):
    n_layers = len(params)
    k = kernel_size
    cin0 = params[0]["conv1_w"].shape[1]
    chans = [cin0] + [p["conv1_w"].shape[0] for p in params]
    C = _round_up(max(max(chans), 128), 128)                # lane-dense width
    dilations = tuple(2 ** i for i in range(n_layers))
    p_max = (k - 1) * max(dilations)
    pref = _round_up(p_max, 16) if p_max > 0 else 0         # aligned prefix

    w1s, b1s, w2s, b2s, wds, bds, ds_map = [], [], [], [], [], [], []
    for layer in params:
        w1, b1 = _pack_conv(layer["conv1_w"], layer["conv1_b"], C, compute_dtype)
        w2, b2 = _pack_conv(layer["conv2_w"], layer["conv2_b"], C, compute_dtype)
        w1s.append(w1); b1s.append(b1); w2s.append(w2); b2s.append(b2)
        if "down_w" in layer:
            ds_map.append(len(wds))
            wd = layer["down_w"][:, :, 0].T                  # (Cin, Cout)
            wd = jnp.pad(wd, ((0, C - wd.shape[0]), (0, C - wd.shape[1])))
            bd = jnp.pad(layer["down_b"], (0, C - layer["down_b"].shape[0]))
            wds.append(wd.astype(compute_dtype))
            bds.append(bd.reshape(1, C).astype(jnp.float32))
        else:
            ds_map.append(None)

    packed = {"w1": jnp.stack(w1s), "b1": jnp.stack(b1s),
              "w2": jnp.stack(w2s), "b2": jnp.stack(b2s)}
    if wds:
        packed["wres"] = jnp.stack(wds)
        packed["bres"] = jnp.stack(bds)
    meta = dict(C=C, pref=pref, dilations=dilations, ds_map=tuple(ds_map),
                k=k, out_dim=chans[-1])
    return packed, meta


# ----------------------------------------------------------------------------
# Wrapper: NCL (torch) in / out, single fused pallas_call
# ----------------------------------------------------------------------------
def temporal_conv_net(x_ncl, params, *, kernel_size=3,
                      compute_dtype=jnp.bfloat16, target_rows=256):
    """x_ncl: (B, C_in, L) -> (B, C_out_last, L), matching PyTorch."""
    packed, meta = _pack_tcn_params(params, kernel_size, compute_dtype)
    B, Cin, L = x_ncl.shape
    C, pref, k = meta["C"], meta["pref"], meta["k"]
    dilations, ds_map = meta["dilations"], meta["ds_map"]
    n_layers = len(dilations)
    has_ds = "wres" in packed
    kC = k * C
    itemsize = jnp.dtype(compute_dtype).itemsize

    # Ragged-L guard: pad time to the sublane tile so activation stores are
    # aligned & unmasked (causal conv: padded rows never affect t < L).
    Lp = _round_up(max(L, 1), 16)

    # Fold batch elements into the matmul M dimension: TB*Lp rows per pass.
    # target_rows=256 fills the v6e/v7x MXU; 128 already saturates v5e.
    TB = max(1, min(B, _cdiv(target_rows, Lp)))
    Bp = _round_up(B, TB)

    # One-time layout prep (single fused XLA pass): NCL -> NLC, zero causal
    # prefix on time, lane-dense channel pad, batch pad to a multiple of TB.
    x = jnp.transpose(x_ncl, (0, 2, 1)).astype(compute_dtype)
    x = jnp.pad(x, ((0, Bp - B), (pref, Lp - L), (0, C - Cin)))

    kern = functools.partial(
        _tcn_stack_kernel, k=k, dilations=dilations, ds_map=ds_map,
        Lp=Lp, pref=pref, C=C, TB=TB, cdtype=compute_dtype)

    # Weights/biases have constant block indices -> single-buffer them.
    const_map = lambda b: (0, 0, 0)
    in_specs = [
        pl.BlockSpec((TB, pref + Lp, C), lambda b: (b, 0, 0)),          # x
        pl.BlockSpec((n_layers, kC, C), const_map,
                     pipeline_mode=pl.Buffered(1)),                      # w1
        pl.BlockSpec((n_layers, 1, C), const_map,
                     pipeline_mode=pl.Buffered(1)),                      # b1
        pl.BlockSpec((n_layers, kC, C), const_map,
                     pipeline_mode=pl.Buffered(1)),                      # w2
        pl.BlockSpec((n_layers, 1, C), const_map,
                     pipeline_mode=pl.Buffered(1)),                      # b2
    ]
    args = [x, packed["w1"], packed["b1"], packed["w2"], packed["b2"]]
    n_ds = 0
    if has_ds:
        n_ds = packed["wres"].shape[0]
        in_specs += [
            pl.BlockSpec((n_ds, C, C), const_map,
                         pipeline_mode=pl.Buffered(1)),                  # wres
            pl.BlockSpec((n_ds, 1, C), const_map,
                         pipeline_mode=pl.Buffered(1)),                  # bres
        ]
        args += [packed["wres"], packed["bres"]]

    # Cost estimate (two k-tap convs + optional 1x1 residual conv per layer).
    flops = 0
    for i in range(n_layers):
        flops += 2 * 2 * Bp * Lp * kC * C
        if ds_map[i] is not None:
            flops += 2 * Bp * Lp * C * C
    bytes_accessed = (int(x.size) * itemsize + Bp * Lp * C * itemsize
                      + sum(int(v.size) * v.dtype.itemsize
                            for v in packed.values()))
    cost = pl.CostEstimate(flops=int(flops), transcendentals=0,
                           bytes_accessed=int(bytes_accessed))

    # Explicit scoped-VMEM budget (defaults: v5e 16 MiB, v6e/v7x 32 MiB).
    vmem_need = (2 * TB * (pref + Lp) * C * itemsize      # x block, 2-buffered
                 + 2 * TB * Lp * C * itemsize             # out block, 2-buffered
                 + 2 * TB * (pref + Lp) * C * itemsize    # cur + tmp scratch
                 + TB * Lp * kC * itemsize                # taps scratch
                 + 2 * n_layers * kC * C * itemsize       # w1 + w2 (1-buffered)
                 + 2 * n_layers * C * 4                   # biases (f32)
                 + n_ds * (C * C * itemsize + C * 4))
    vmem_limit = int(min(max(2 * vmem_need, 32 * 2**20), 64 * 2**20))

    out = pl.pallas_call(
        kern,
        out_shape=jax.ShapeDtypeStruct((Bp, Lp, C), compute_dtype),
        grid_spec=pltpu.PrefetchScalarGridSpec(
            num_scalar_prefetch=0,
            grid=(Bp // TB,),
            in_specs=in_specs,
            out_specs=pl.BlockSpec((TB, Lp, C), lambda b: (b, 0, 0)),
            scratch_shapes=[pltpu.VMEM((TB, pref + Lp, C), compute_dtype),
                            pltpu.VMEM((TB, pref + Lp, C), compute_dtype),
                            pltpu.VMEM((TB, Lp, kC), compute_dtype)],
        ),
        compiler_params=pltpu.CompilerParams(
            dimension_semantics=("parallel",),
            vmem_limit_bytes=vmem_limit),
        cost_estimate=cost,
    )(*args)

    # TODO(synk): downstream consumers that accept padded NLC can take `out`
    # directly and skip this trim/transpose HBM pass.
    out = out[:B, :L, :meta["out_dim"]]
    return jnp.transpose(out, (0, 2, 1))     # NLC -> NCL


# ----------------------------------------------------------------------------
# Param init (torch Conv1d layouts) + pure-JAX reference mirroring PyTorch
# ----------------------------------------------------------------------------
def init_tcn_params(key, input_dim, num_channels, kernel_size=3):
    params = []
    in_ch = input_dim
    for out_ch in num_channels:
        key, k1, k2, k3, k4, k5, k6 = jax.random.split(key, 7)
        layer = {
            "conv1_w": 0.1 * jax.random.normal(k1, (out_ch, in_ch, kernel_size),
                                               jnp.float32),
            "conv1_b": 0.1 * jax.random.normal(k2, (out_ch,), jnp.float32),
            "conv2_w": 0.1 * jax.random.normal(k3, (out_ch, out_ch, kernel_size),
                                               jnp.float32),
            "conv2_b": 0.1 * jax.random.normal(k4, (out_ch,), jnp.float32),
        }
        if in_ch != out_ch:
            layer["down_w"] = 0.1 * jax.random.normal(k5, (out_ch, in_ch, 1),
                                                      jnp.float32)
            layer["down_b"] = 0.1 * jax.random.normal(k6, (out_ch,), jnp.float32)
        params.append(layer)
        in_ch = out_ch
    return params


def _ref_tcn(x_ncl, params, kernel_size=3):
    """Pure-JAX mirror of the PyTorch module (pad both sides + right trim)."""
    dn = ("NCH", "OIH", "NCH")

    def conv(inp, w, b, dil, pad):
        y = jax.lax.conv_general_dilated(
            inp, w, window_strides=(1,), padding=[(pad, pad)],
            rhs_dilation=(dil,), dimension_numbers=dn)
        return y + b[None, :, None]

    x = x_ncl
    for i, layer in enumerate(params):
        d = 2 ** i
        p = (kernel_size - 1) * d
        o = jax.nn.relu(conv(x, layer["conv1_w"], layer["conv1_b"], d, p))
        o = jax.nn.relu(conv(o, layer["conv2_w"], layer["conv2_b"], d, p))
        if "down_w" in layer:
            res = conv(x, layer["down_w"], layer["down_b"], 1, 0)
        else:
            res = x
        L = x.shape[2]
        o = o[:, :, :L]                  # out is longer than res -> trim right
        x = jax.nn.relu(o + res)
    return x


# ----------------------------------------------------------------------------
if __name__ == "__main__":
    key = jax.random.PRNGKey(0)
    k_x, k_p = jax.random.split(key)

    # TemporalConvNet(input_dim=4, num_channels=[8, 16], kernel_size=3)
    input_dim = 4
    num_channels = [8, 16]
    kernel_size = 3
    B, L = 2, 16

    x = jax.random.normal(k_x, (B, input_dim, L), jnp.float32)   # NCL like torch
    params = init_tcn_params(k_p, input_dim, num_channels, kernel_size)

    ref = _ref_tcn(x, params, kernel_size)

    # Exactness check: f32 compute path must match the PyTorch-equivalent ref.
    out_f32 = temporal_conv_net(x, params, kernel_size=kernel_size,
                                compute_dtype=jnp.float32)
    out_f32 = jax.block_until_ready(out_f32)
    assert out_f32.shape == (B, num_channels[-1], L), out_f32.shape
    assert jnp.allclose(out_f32.astype(jnp.float32), ref,
                        rtol=1e-3, atol=1e-3), "f32 mismatch"

    # Performance path: bf16 operands on the MXU, f32 accumulation/epilogue.
    out_bf16 = temporal_conv_net(x, params, kernel_size=kernel_size,
                                 compute_dtype=jnp.bfloat16)
    out_bf16 = jax.block_until_ready(out_bf16)
    assert out_bf16.shape == (B, num_channels[-1], L), out_bf16.shape
    assert jnp.allclose(out_bf16.astype(jnp.float32), ref,
                        rtol=5e-2, atol=5e-2), "bf16 mismatch"

    print("KERNEL_OK")
</pallas_src>

<mosaic_0001>
module attributes {stable_mosaic.version = 11 : i64} {
  func.func @_tcn_stack_kernel(%arg0: i32, %arg1: memref<2x32x128xf32, #tpu.memory_space<vmem>>, %arg2: memref<2x384x128xf32, #tpu.memory_space<vmem>>, %arg3: memref<2x1x128xf32, #tpu.memory_space<vmem>>, %arg4: memref<2x384x128xf32, #tpu.memory_space<vmem>>, %arg5: memref<2x1x128xf32, #tpu.memory_space<vmem>>, %arg6: memref<2x128x128xf32, #tpu.memory_space<vmem>>, %arg7: memref<2x1x128xf32, #tpu.memory_space<vmem>>, %arg8: memref<2x16x128xf32, #tpu.memory_space<vmem>>, %arg9: memref<2x32x128xf32, #tpu.memory_space<vmem>>, %arg10: memref<2x32x128xf32, #tpu.memory_space<vmem>>, %arg11: memref<2x16x384xf32, #tpu.memory_space<vmem>>) attributes {dimension_semantics = [#tpu.dimension_semantics<parallel>], iteration_bounds = array<i64: 1>, scalar_prefetch = 0 : i64, scratch_operands = 3 : i64, tpu.core_type = #tpu.core_type<tc>, window_params = [{transform_indices = @transform_0, window_bounds = array<i64: 2, 32, 128>}, {pipeline_mode = #tpu.pipeline_mode<synchronous>, transform_indices = @transform_1, window_bounds = array<i64: 2, 384, 128>}, {pipeline_mode = #tpu.pipeline_mode<synchronous>, transform_indices = @transform_2, window_bounds = array<i64: 2, 1, 128>}, {pipeline_mode = #tpu.pipeline_mode<synchronous>, transform_indices = @transform_3, window_bounds = array<i64: 2, 384, 128>}, {pipeline_mode = #tpu.pipeline_mode<synchronous>, transform_indices = @transform_4, window_bounds = array<i64: 2, 1, 128>}, {pipeline_mode = #tpu.pipeline_mode<synchronous>, transform_indices = @transform_5, window_bounds = array<i64: 2, 128, 128>}, {pipeline_mode = #tpu.pipeline_mode<synchronous>, transform_indices = @transform_6, window_bounds = array<i64: 2, 1, 128>}, {transform_indices = @transform_7, window_bounds = array<i64: 2, 16, 128>}]} {
    %cst = arith.constant 0.000000e+00 : f32
    %0 = vector.broadcast %cst : f32 to vector<2x16x128xf32>
    %c0 = arith.constant 0 : index
    %c0_0 = arith.constant 0 : index
    %c0_1 = arith.constant 0 : index
    %1 = vector.load %arg9[%c0, %c0_0, %c0_1] : memref<2x32x128xf32, #tpu.memory_space<vmem>>, vector<2x16x128xf32>
    tpu.vector_store %arg9[%c0, %c0_0, %c0_1], %0 {strides = array<i32>} : memref<2x32x128xf32, #tpu.memory_space<vmem>>, vector<2x16x128xf32>,
    %c0_2 = arith.constant 0 : index
    %c0_3 = arith.constant 0 : index
    %c0_4 = arith.constant 0 : index
    %2 = vector.load %arg10[%c0_2, %c0_3, %c0_4] : memref<2x32x128xf32, #tpu.memory_space<vmem>>, vector<2x16x128xf32>
    tpu.vector_store %arg10[%c0_2, %c0_3, %c0_4], %0 {strides = array<i32>} : memref<2x32x128xf32, #tpu.memory_space<vmem>>, vector<2x16x128xf32>,
    %c0_5 = arith.constant 0 : index
    %c14 = arith.constant 14 : index
    %c0_6 = arith.constant 0 : index
    %3 = vector.load %arg1[%c0_5, %c14, %c0_6] : memref<2x32x128xf32, #tpu.memory_space<vmem>>, vector<2x16x128xf32>
    %c0_7 = arith.constant 0 : index
    %c0_8 = arith.constant 0 : index
    %c0_9 = arith.constant 0 : index
    %4 = vector.load %arg11[%c0_7, %c0_8, %c0_9] : memref<2x16x384xf32, #tpu.memory_space<vmem>>, vector<2x16x128xf32>
    tpu.vector_store %arg11[%c0_7, %c0_8, %c0_9], %3 {strides = array<i32>} : memref<2x16x384xf32, #tpu.memory_space<vmem>>, vector<2x16x128xf32>,
    %c0_10 = arith.constant 0 : index
    %c15 = arith.constant 15 : index
    %c0_11 = arith.constant 0 : index
    %5 = vector.load %arg1[%c0_10, %c15, %c0_11] : memref<2x32x128xf32, #tpu.memory_space<vmem>>, vector<2x16x128xf32>
    %c0_12 = arith.constant 0 : index
    %c0_13 = arith.constant 0 : index
    %c128 = arith.constant 128 : index
    %6 = vector.load %arg11[%c0_12, %c0_13, %c128] : memref<2x16x384xf32, #tpu.memory_space<vmem>>, vector<2x16x128xf32>
    tpu.vector_store %arg11[%c0_12, %c0_13, %c128], %5 {strides = array<i32>} : memref<2x16x384xf32, #tpu.memory_space<vmem>>, vector<2x16x128xf32>,
    %c0_14 = arith.constant 0 : index
    %c16 = arith.constant 16 : index
    %c0_15 = arith.constant 0 : index
    %7 = vector.load %arg1[%c0_14, %c16, %c0_15] : memref<2x32x128xf32, #tpu.memory_space<vmem>>, vector<2x16x128xf32>
    %c0_16 = arith.constant 0 : index
    %c0_17 = arith.constant 0 : index
    %c256 = arith.constant 256 : index
    %8 = vector.load %arg11[%c0_16, %c0_17, %c256] : memref<2x16x384xf32, #tpu.memory_space<vmem>>, vector<2x16x128xf32>
    tpu.vector_store %arg11[%c0_16, %c0_17, %c256], %7 {strides = array<i32>} : memref<2x16x384xf32, #tpu.memory_space<vmem>>, vector<2x16x128xf32>,
    %c0_18 = arith.constant 0 : index
    %c0_19 = arith.constant 0 : index
    %c0_20 = arith.constant 0 : index
    %9 = vector.load %arg11[%c0_18, %c0_19, %c0_20] : memref<2x16x384xf32, #tpu.memory_space<vmem>>, vector<2x16x384xf32>
    %10 = vector.shape_cast %9 : vector<2x16x384xf32> to vector<32x384xf32>
    %c0_21 = arith.constant 0 : index
    %c0_22 = arith.constant 0 : index
    %c0_23 = arith.constant 0 : index
    %11 = vector.load %arg2[%c0_21, %c0_22, %c0_23] : memref<2x384x128xf32, #tpu.memory_space<vmem>>, vector<1x384x128xf32>
    %12 = vector.shape_cast %11 : vector<1x384x128xf32> to vector<384x128xf32>
    %cst_24 = arith.constant dense<0.000000e+00> : vector<32x128xf32>
    %13 = tpu.matmul %10, %12, %cst_24 {dimension_numbers = #tpu.dot_dimension_numbers<[1], [0], [0], [1], [0, 0, 1, 1], [], []>} : vector<32x384xf32>, vector<384x128xf32>, vector<32x128xf32> -> vector<32x128xf32>
    %c0_25 = arith.constant 0 : index
    %c0_26 = arith.constant 0 : index
    %c0_27 = arith.constant 0 : index
    %14 = vector.load %arg3[%c0_25, %c0_26, %c0_27] : memref<2x1x128xf32, #tpu.memory_space<vmem>>, vector<1x1x128xf32>
    %15 = vector.shape_cast %14 : vector<1x1x128xf32> to vector<1x128xf32>
    %16 = vector.broadcast %15 : vector<1x128xf32> to vector<32x128xf32>
    %17 = arith.addf %13, %16 : vector<32x128xf32>
    %cst_28 = arith.constant 0.000000e+00 : f32
    %18 = vector.broadcast %cst_28 : f32 to vector<32x128xf32>
    %19 = arith.maximumf %17, %18 : vector<32x128xf32>
    %20 = vector.shape_cast %19 : vector<32x128xf32> to vector<2x16x128xf32>
    %c0_29 = arith.constant 0 : index
    %c16_30 = arith.constant 16 : index
    %c0_31 = arith.constant 0 : index
    %21 = vector.load %arg10[%c0_29, %c16_30, %c0_31] : memref<2x32x128xf32, #tpu.memory_space<vmem>>, vector<2x16x128xf32>
    tpu.vector_store %arg10[%c0_29, %c16_30, %c0_31], %20 {strides = array<i32>} : memref<2x32x128xf32, #tpu.memory_space<vmem>>, vector<2x16x128xf32>,
    %c0_32 = arith.constant 0 : index
    %c14_33 = arith.constant 14 : index
    %c0_34 = arith.constant 0 : index
    %22 = vector.load %arg10[%c0_32, %c14_33, %c0_34] : memref<2x32x128xf32, #tpu.memory_space<vmem>>, vector<2x16x128xf32>
    %c0_35 = arith.constant 0 : index
    %c0_36 = arith.constant 0 : index
    %c0_37 = arith.constant 0 : index
    %23 = vector.load %arg11[%c0_35, %c0_36, %c0_37] : memref<2x16x384xf32, #tpu.memory_space<vmem>>, vector<2x16x128xf32>
    tpu.vector_store %arg11[%c0_35, %c0_36, %c0_37], %22 {strides = array<i32>} : memref<2x16x384xf32, #tpu.memory_space<vmem>>, vector<2x16x128xf32>,
    %c0_38 = arith.constant 0 : index
    %c15_39 = arith.constant 15 : index
    %c0_40 = arith.constant 0 : index
    %24 = vector.load %arg10[%c0_38, %c15_39, %c0_40] : memref<2x32x128xf32, #tpu.memory_space<vmem>>, vector<2x16x128xf32>
    %c0_41 = arith.constant 0 : index
    %c0_42 = arith.constant 0 : index
    %c128_43 = arith.constant 128 : index
    %25 = vector.load %arg11[%c0_41, %c0_42, %c128_43] : memref<2x16x384xf32, #tpu.memory_space<vmem>>, vector<2x16x128xf32>
    tpu.vector_store %arg11[%c0_41, %c0_42, %c128_43], %24 {strides = array<i32>} : memref<2x16x384xf32, #tpu.memory_space<vmem>>, vector<2x16x128xf32>,
    %c0_44 = arith.constant 0 : index
    %c16_45 = arith.constant 16 : index
    %c0_46 = arith.constant 0 : index
    %26 = vector.load %arg10[%c0_44, %c16_45, %c0_46] : memref<2x32x128xf32, #tpu.memory_space<vmem>>, vector<2x16x128xf32>
    %c0_47 = arith.constant 0 : index
    %c0_48 = arith.constant 0 : index
    %c256_49 = arith.constant 256 : index
    %27 = vector.load %arg11[%c0_47, %c0_48, %c256_49] : memref<2x16x384xf32, #tpu.memory_space<vmem>>, vector<2x16x128xf32>
    tpu.vector_store %arg11[%c0_47, %c0_48, %c256_49], %26 {strides = array<i32>} : memref<2x16x384xf32, #tpu.memory_space<vmem>>, vector<2x16x128xf32>,
    %c0_50 = arith.constant 0 : index
    %c0_51 = arith.constant 0 : index
    %c0_52 = arith.constant 0 : index
    %28 = vector.load %arg11[%c0_50, %c0_51, %c0_52] : memref<2x16x384xf32, #tpu.memory_space<vmem>>, vector<2x16x384xf32>
    %29 = vector.shape_cast %28 : vector<2x16x384xf32> to vector<32x384xf32>
    %c0_53 = arith.constant 0 : index
    %c0_54 = arith.constant 0 : index
    %c0_55 = arith.constant 0 : index
    %30 = vector.load %arg4[%c0_53, %c0_54, %c0_55] : memref<2x384x128xf32, #tpu.memory_space<vmem>>, vector<1x384x128xf32>
    %31 = vector.shape_cast %30 : vector<1x384x128xf32> to vector<384x128xf32>
    %cst_56 = arith.constant dense<0.000000e+00> : vector<32x128xf32>
    %32 = tpu.matmul %29, %31, %cst_56 {dimension_numbers = #tpu.dot_dimension_numbers<[1], [0], [0], [1], [0, 0, 1, 1], [], []>} : vector<32x384xf32>, vector<384x128xf32>, vector<32x128xf32> -> vector<32x128xf32>
    %c0_57 = arith.constant 0 : index
    %c0_58 = arith.constant 0 : index
    %c0_59 = arith.constant 0 : index
    %33 = vector.load %arg5[%c0_57, %c0_58, %c0_59] : memref<2x1x128xf32, #tpu.memory_space<vmem>>, vector<1x1x128xf32>
    %34 = vector.shape_cast %33 : vector<1x1x128xf32> to vector<1x128xf32>
    %35 = vector.broadcast %34 : vector<1x128xf32> to vector<32x128xf32>
    %36 = arith.addf %32, %35 : vector<32x128xf32>
    %cst_60 = arith.constant 0.000000e+00 : f32
    %37 = vector.broadcast %cst_60 : f32 to vector<32x128xf32>
    %38 = arith.maximumf %36, %37 : vector<32x128xf32>
    %c0_61 = arith.constant 0 : index
    %c16_62 = arith.constant 16 : index
    %c0_63 = arith.constant 0 : index
    %39 = vector.load %arg1[%c0_61, %c16_62, %c0_63] : memref<2x32x128xf32, #tpu.memory_space<vmem>>, vector<2x16x128xf32>
    %40 = vector.shape_cast %39 : vector<2x16x128xf32> to vector<32x128xf32>
    %c0_64 = arith.constant 0 : index
    %c0_65 = arith.constant 0 : index
    %c0_66 = arith.constant 0 : index
    %41 = vector.load %arg6[%c0_64, %c0_65, %c0_66] : memref<2x128x128xf32, #tpu.memory_space<vmem>>, vector<1x128x128xf32>
    %42 = vector.shape_cast %41 : vector<1x128x128xf32> to vector<128x128xf32>
    %cst_67 = arith.constant dense<0.000000e+00> : vector<32x128xf32>
    %43 = tpu.matmul %40, %42, %cst_67 {dimension_numbers = #tpu.dot_dimension_numbers<[1], [0], [0], [1], [0, 0, 1, 1], [], []>} : vector<32x128xf32>, vector<128x128xf32>, vector<32x128xf32> -> vector<32x128xf32>
    %c0_68 = arith.constant 0 : index
    %c0_69 = arith.constant 0 : index
    %c0_70 = arith.constant 0 : index
    %44 = vector.load %arg7[%c0_68, %c0_69, %c0_70] : memref<2x1x128xf32, #tpu.memory_space<vmem>>, vector<1x1x128xf32>
    %45 = vector.shape_cast %44 : vector<1x1x128xf32> to vector<1x128xf32>
    %46 = vector.broadcast %45 : vector<1x128xf32> to vector<32x128xf32>
    %47 = arith.addf %43, %46 : vector<32x128xf32>
    %48 = arith.addf %38, %47 : vector<32x128xf32>
    %cst_71 = arith.constant 0.000000e+00 : f32
    %49 = vector.broadcast %cst_71 : f32 to vector<32x128xf32>
    %50 = arith.maximumf %48, %49 : vector<32x128xf32>
    %51 = vector.shape_cast %50 : vector<32x128xf32> to vector<2x16x128xf32>
    %c0_72 = arith.constant 0 : index
    %c16_73 = arith.constant 16 : index
    %c0_74 = arith.constant 0 : index
    %52 = vector.load %arg9[%c0_72, %c16_73, %c0_74] : memref<2x32x128xf32, #tpu.memory_space<vmem>>, vector<2x16x128xf32>
    tpu.vector_store %arg9[%c0_72, %c16_73, %c0_74], %51 {strides = array<i32>} : memref<2x32x128xf32, #tpu.memory_space<vmem>>, vector<2x16x128xf32>,
    %c0_75 = arith.constant 0 : index
    %c12 = arith.constant 12 : index
    %c0_76 = arith.constant 0 : index
    %53 = vector.load %arg9[%c0_75, %c12, %c0_76] : memref<2x32x128xf32, #tpu.memory_space<vmem>>, vector<2x16x128xf32>
    %c0_77 = arith.constant 0 : index
    %c0_78 = arith.constant 0 : index
    %c0_79 = arith.constant 0 : index
    %54 = vector.load %arg11[%c0_77, %c0_78, %c0_79] : memref<2x16x384xf32, #tpu.memory_space<vmem>>, vector<2x16x128xf32>
    tpu.vector_store %arg11[%c0_77, %c0_78, %c0_79], %53 {strides = array<i32>} : memref<2x16x384xf32, #tpu.memory_space<vmem>>, vector<2x16x128xf32>,
    %c0_80 = arith.constant 0 : index
    %c14_81 = arith.constant 14 : index
    %c0_82 = arith.constant 0 : index
    %55 = vector.load %arg9[%c0_80, %c14_81, %c0_82] : memref<2x32x128xf32, #tpu.memory_space<vmem>>, vector<2x16x128xf32>
    %c0_83 = arith.constant 0 : index
    %c0_84 = arith.constant 0 : index
    %c128_85 = arith.constant 128 : index
    %56 = vector.load %arg11[%c0_83, %c0_84, %c128_85] : memref<2x16x384xf32, #tpu.memory_space<vmem>>, vector<2x16x128xf32>
    tpu.vector_store %arg11[%c0_83, %c0_84, %c128_85], %55 {strides = array<i32>} : memref<2x16x384xf32, #tpu.memory_space<vmem>>, vector<2x16x128xf32>,
    %c0_86 = arith.constant 0 : index
    %c16_87 = arith.constant 16 : index
    %c0_88 = arith.constant 0 : index
    %57 = vector.load %arg9[%c0_86, %c16_87, %c0_88] : memref<2x32x128xf32, #tpu.memory_space<vmem>>, vector<2x16x128xf32>
    %c0_89 = arith.constant 0 : index
    %c0_90 = arith.constant 0 : index
    %c256_91 = arith.constant 256 : index
    %58 = vector.load %arg11[%c0_89, %c0_90, %c256_91] : memref<2x16x384xf32, #tpu.memory_space<vmem>>, vector<2x16x128xf32>
    tpu.vector_store %arg11[%c0_89, %c0_90, %c256_91], %57 {strides = array<i32>} : memref<2x16x384xf32, #tpu.memory_space<vmem>>, vector<2x16x128xf32>,
    %c0_92 = arith.constant 0 : index
    %c0_93 = arith.constant 0 : index
    %c0_94 = arith.constant 0 : index
    %59 = vector.load %arg11[%c0_92, %c0_93, %c0_94] : memref<2x16x384xf32, #tpu.memory_space<vmem>>, vector<2x16x384xf32>
    %60 = vector.shape_cast %59 : vector<2x16x384xf32> to vector<32x384xf32>
    %c1 = arith.constant 1 : index
    %c0_95 = arith.constant 0 : index
    %c0_96 = arith.constant 0 : index
    %61 = vector.load %arg2[%c1, %c0_95, %c0_96] : memref<2x384x128xf32, #tpu.memory_space<vmem>>, vector<1x384x128xf32>
    %62 = vector.shape_cast %61 : vector<1x384x128xf32> to vector<384x128xf32>
    %cst_97 = arith.constant dense<0.000000e+00> : vector<32x128xf32>
    %63 = tpu.matmul %60, %62, %cst_97 {dimension_numbers = #tpu.dot_dimension_numbers<[1], [0], [0], [1], [0, 0, 1, 1], [], []>} : vector<32x384xf32>, vector<384x128xf32>, vector<32x128xf32> -> vector<32x128xf32>
    %c1_98 = arith.constant 1 : index
    %c0_99 = arith.constant 0 : index
    %c0_100 = arith.constant 0 : index
    %64 = vector.load %arg3[%c1_98, %c0_99, %c0_100] : memref<2x1x128xf32, #tpu.memory_space<vmem>>, vector<1x1x128xf32>
    %65 = vector.shape_cast %64 : vector<1x1x128xf32> to vector<1x128xf32>
    %66 = vector.broadcast %65 : vector<1x128xf32> to vector<32x128xf32>
    %67 = arith.addf %63, %66 : vector<32x128xf32>
    %cst_101 = arith.constant 0.000000e+00 : f32
    %68 = vector.broadcast %cst_101 : f32 to vector<32x128xf32>
    %69 = arith.maximumf %67, %68 : vector<32x128xf32>
    %70 = vector.shape_cast %69 : vector<32x128xf32> to vector<2x16x128xf32>
    %c0_102 = arith.constant 0 : index
    %c16_103 = arith.constant 16 : index
    %c0_104 = arith.constant 0 : index
    %71 = vector.load %arg10[%c0_102, %c16_103, %c0_104] : memref<2x32x128xf32, #tpu.memory_space<vmem>>, vector<2x16x128xf32>
    tpu.vector_store %arg10[%c0_102, %c16_103, %c0_104], %70 {strides = array<i32>} : memref<2x32x128xf32, #tpu.memory_space<vmem>>, vector<2x16x128xf32>,
    %c0_105 = arith.constant 0 : index
    %c12_106 = arith.constant 12 : index
    %c0_107 = arith.constant 0 : index
    %72 = vector.load %arg10[%c0_105, %c12_106, %c0_107] : memref<2x32x128xf32, #tpu.memory_space<vmem>>, vector<2x16x128xf32>
    %c0_108 = arith.constant 0 : index
    %c0_109 = arith.constant 0 : index
    %c0_110 = arith.constant 0 : index
    %73 = vector.load %arg11[%c0_108, %c0_109, %c0_110] : memref<2x16x384xf32, #tpu.memory_space<vmem>>, vector<2x16x128xf32>
    tpu.vector_store %arg11[%c0_108, %c0_109, %c0_110], %72 {strides = array<i32>} : memref<2x16x384xf32, #tpu.memory_space<vmem>>, vector<2x16x128xf32>,
    %c0_111 = arith.constant 0 : index
    %c14_112 = arith.constant 14 : index
    %c0_113 = arith.constant 0 : index
    %74 = vector.load %arg10[%c0_111, %c14_112, %c0_113] : memref<2x32x128xf32, #tpu.memory_space<vmem>>, vector<2x16x128xf32>
    %c0_114 = arith.constant 0 : index
    %c0_115 = arith.constant 0 : index
    %c128_116 = arith.constant 128 : index
    %75 = vector.load %arg11[%c0_114, %c0_115, %c128_116] : memref<2x16x384xf32, #tpu.memory_space<vmem>>, vector<2x16x128xf32>
    tpu.vector_store %arg11[%c0_114, %c0_115, %c128_116], %74 {strides = array<i32>} : memref<2x16x384xf32, #tpu.memory_space<vmem>>, vector<2x16x128xf32>,
    %c0_117 = arith.constant 0 : index
    %c16_118 = arith.constant 16 : index
    %c0_119 = arith.constant 0 : index
    %76 = vector.load %arg10[%c0_117, %c16_118, %c0_119] : memref<2x32x128xf32, #tpu.memory_space<vmem>>, vector<2x16x128xf32>
    %c0_120 = arith.constant 0 : index
    %c0_121 = arith.constant 0 : index
    %c256_122 = arith.constant 256 : index
    %77 = vector.load %arg11[%c0_120, %c0_121, %c256_122] : memref<2x16x384xf32, #tpu.memory_space<vmem>>, vector<2x16x128xf32>
    tpu.vector_store %arg11[%c0_120, %c0_121, %c256_122], %76 {strides = array<i32>} : memref<2x16x384xf32, #tpu.memory_space<vmem>>, vector<2x16x128xf32>,
    %c0_123 = arith.constant 0 : index
    %c0_124 = arith.constant 0 : index
    %c0_125 = arith.constant 0 : index
    %78 = vector.load %arg11[%c0_123, %c0_124, %c0_125] : memref<2x16x384xf32, #tpu.memory_space<vmem>>, vector<2x16x384xf32>
    %79 = vector.shape_cast %78 : vector<2x16x384xf32> to vector<32x384xf32>
    %c1_126 = arith.constant 1 : index
    %c0_127 = arith.constant 0 : index
    %c0_128 = arith.constant 0 : index
    %80 = vector.load %arg4[%c1_126, %c0_127, %c0_128] : memref<2x384x128xf32, #tpu.memory_space<vmem>>, vector<1x384x128xf32>
    %81 = vector.shape_cast %80 : vector<1x384x128xf32> to vector<384x128xf32>
    %cst_129 = arith.constant dense<0.000000e+00> : vector<32x128xf32>
    %82 = tpu.matmul %79, %81, %cst_129 {dimension_numbers = #tpu.dot_dimension_numbers<[1], [0], [0], [1], [0, 0, 1, 1], [], []>} : vector<32x384xf32>, vector<384x128xf32>, vector<32x128xf32> -> vector<32x128xf32>
    %c1_130 = arith.constant 1 : index
    %c0_131 = arith.constant 0 : index
    %c0_132 = arith.constant 0 : index
    %83 = vector.load %arg5[%c1_130, %c0_131, %c0_132] : memref<2x1x128xf32, #tpu.memory_space<vmem>>, vector<1x1x128xf32>
    %84 = vector.shape_cast %83 : vector<1x1x128xf32> to vector<1x128xf32>
    %85 = vector.broadcast %84 : vector<1x128xf32> to vector<32x128xf32>
    %86 = arith.addf %82, %85 : vector<32x128xf32>
    %cst_133 = arith.constant 0.000000e+00 : f32
    %87 = vector.broadcast %cst_133 : f32 to vector<32x128xf32>
    %88 = arith.maximumf %86, %87 : vector<32x128xf32>
    %c0_134 = arith.constant 0 : index
    %c16_135 = arith.constant 16 : index
    %c0_136 = arith.constant 0 : index
    %89 = vector.load %arg9[%c0_134, %c16_135, %c0_136] : memref<2x32x128xf32, #tpu.memory_space<vmem>>, vector<2x16x128xf32>
    %90 = vector.shape_cast %89 : vector<2x16x128xf32> to vector<32x128xf32>
    %c1_137 = arith.constant 1 : index
    %c0_138 = arith.constant 0 : index
    %c0_139 = arith.constant 0 : index
    %91 = vector.load %arg6[%c1_137, %c0_138, %c0_139] : memref<2x128x128xf32, #tpu.memory_space<vmem>>, vector<1x128x128xf32>
    %92 = vector.shape_cast %91 : vector<1x128x128xf32> to vector<128x128xf32>
    %cst_140 = arith.constant dense<0.000000e+00> : vector<32x128xf32>
    %93 = tpu.matmul %90, %92, %cst_140 {dimension_numbers = #tpu.dot_dimension_numbers<[1], [0], [0], [1], [0, 0, 1, 1], [], []>} : vector<32x128xf32>, vector<128x128xf32>, vector<32x128xf32> -> vector<32x128xf32>
    %c1_141 = arith.constant 1 : index
    %c0_142 = arith.constant 0 : index
    %c0_143 = arith.constant 0 : index
    %94 = vector.load %arg7[%c1_141, %c0_142, %c0_143] : memref<2x1x128xf32, #tpu.memory_space<vmem>>, vector<1x1x128xf32>
    %95 = vector.shape_cast %94 : vector<1x1x128xf32> to vector<1x128xf32>
    %96 = vector.broadcast %95 : vector<1x128xf32> to vector<32x128xf32>
    %97 = arith.addf %93, %96 : vector<32x128xf32>
    %98 = arith.addf %88, %97 : vector<32x128xf32>
    %cst_144 = arith.constant 0.000000e+00 : f32
    %99 = vector.broadcast %cst_144 : f32 to vector<32x128xf32>
    %100 = arith.maximumf %98, %99 : vector<32x128xf32>
    %101 = vector.shape_cast %100 : vector<32x128xf32> to vector<2x16x128xf32>
    %c0_145 = arith.constant 0 : index
    %c0_146 = arith.constant 0 : index
    %c0_147 = arith.constant 0 : index
    %102 = vector.load %arg8[%c0_145, %c0_146, %c0_147] : memref<2x16x128xf32, #tpu.memory_space<vmem>>, vector<2x16x128xf32>
    tpu.vector_store %arg8[%c0_145, %c0_146, %c0_147], %101 {strides = array<i32>} : memref<2x16x128xf32, #tpu.memory_space<vmem>>, vector<2x16x128xf32>,
    return
  }
  func.func @transform_0(%arg0: i32) -> (i32, i32, i32) {
    %c0_i32 = arith.constant 0 : i32
    %c0_i32_0 = arith.constant 0 : i32
    %c0_i32_1 = arith.constant 0 : i32
    return %arg0, %c0_i32, %c0_i32_0 : i32, i32, i32
  }
  func.func @transform_1(%arg0: i32) -> (i32, i32, i32) {
    %c0_i32 = arith.constant 0 : i32
    %c0_i32_0 = arith.constant 0 : i32
    %c0_i32_1 = arith.constant 0 : i32
    %c0_i32_2 = arith.constant 0 : i32
    return %c0_i32, %c0_i32_0, %c0_i32_1 : i32, i32, i32
  }
  func.func @transform_2(%arg0: i32) -> (i32, i32, i32) {
    %c0_i32 = arith.constant 0 : i32
    %c0_i32_0 = arith.constant 0 : i32
    %c0_i32_1 = arith.constant 0 : i32
    %c0_i32_2 = arith.constant 0 : i32
    return %c0_i32, %c0_i32_0, %c0_i32_1 : i32, i32, i32
  }
  func.func @transform_3(%arg0: i32) -> (i32, i32, i32) {
    %c0_i32 = arith.constant 0 : i32
    %c0_i32_0 = arith.constant 0 : i32
    %c0_i32_1 = arith.constant 0 : i32
    %c0_i32_2 = arith.constant 0 : i32
    return %c0_i32, %c0_i32_0, %c0_i32_1 : i32, i32, i32
  }
  func.func @transform_4(%arg0: i32) -> (i32, i32, i32) {
    %c0_i32 = arith.constant 0 : i32
    %c0_i32_0 = arith.constant 0 : i32
    %c0_i32_1 = arith.constant 0 : i32
    %c0_i32_2 = arith.constant 0 : i32
    return %c0_i32, %c0_i32_0, %c0_i32_1 : i32, i32, i32
  }
  func.func @transform_5(%arg0: i32) -> (i32, i32, i32) {
    %c0_i32 = arith.constant 0 : i32
    %c0_i32_0 = arith.constant 0 : i32
    %c0_i32_1 = arith.constant 0 : i32
    %c0_i32_2 = arith.constant 0 : i32
    return %c0_i32, %c0_i32_0, %c0_i32_1 : i32, i32, i32
  }
  func.func @transform_6(%arg0: i32) -> (i32, i32, i32) {
    %c0_i32 = arith.constant 0 : i32
    %c0_i32_0 = arith.constant 0 : i32
    %c0_i32_1 = arith.constant 0 : i32
    %c0_i32_2 = arith.constant 0 : i32
    return %c0_i32, %c0_i32_0, %c0_i32_1 : i32, i32, i32
  }
  func.func @transform_7(%arg0: i32) -> (i32, i32, i32) {
    %c0_i32 = arith.constant 0 : i32
    %c0_i32_0 = arith.constant 0 : i32
    %c0_i32_1 = arith.constant 0 : i32
    return %arg0, %c0_i32, %c0_i32_0 : i32, i32, i32
  }
}

</mosaic_0001>

<llo_original>
// kernel: tpu_custom_call.1
$region0: #{tpu_custom_call.1}
  #allocation0 [shape = 'u32[]', space=smem, size = 0x4, offset = 0x4, fixed_abs, tag = 'smem constant byte address 0x4 - core index']
  #allocation1 [shape = 'u32[144,128]{1,0:T(1,128)}', space=vmem, size = 0x12000, scoped, tag = 'internal scratch']
  #allocation2 [shape = 'f32[2,32,128]{2,1,0:T(8,128)}', space=vmem, size = 0x8000, scoped, tag = 'scratch operand']
  #allocation3 [shape = 'f32[2,32,128]{2,1,0:T(8,128)}', space=vmem, size = 0x8000, scoped, tag = 'scratch operand']
  #allocation4 [shape = 'f32[2,16,384]{2,1,0:T(8,128)}', space=vmem, size = 0xc000, scoped, tag = 'scratch operand']
  %s0 = inlined_call_operand.hbm [shape: f32[2,32,128], index: 0, kind: input, shape index: {}]
  %s1 = inlined_call_operand.hbm [shape: f32[2,384,128], index: 1, kind: input, shape index: {}]
  %s2 = inlined_call_operand.vmem [shape: f32[2,1,128], index: 2, kind: input, shape index: {}]
  %s3 = inlined_call_operand.hbm [shape: f32[2,384,128], index: 3, kind: input, shape index: {}]
  %s4 = inlined_call_operand.vmem [shape: f32[2,1,128], index: 4, kind: input, shape index: {}]
  %s5 = inlined_call_operand.hbm [shape: f32[2,128,128], index: 5, kind: input, shape index: {}]
  %s6 = inlined_call_operand.vmem [shape: f32[2,1,128], index: 6, kind: input, shape index: {}]
  %s7 = inlined_call_operand.hbm [shape: f32[2,16,128], index: 7, kind: output, shape index: {}]
  %s8 = sld [smem:[#allocation0]]
  $region54: #{tpu_custom_call.1} parent=0
    _
  %s10 = ssub.s32 1, %s8
  %s11 = scalar_select 0, %s10, %s8
  $region1: #{tpu_custom_call.1} parent=0
    #allocation5 [shape = 'u8[32768]{0}', space=vmem, size = 0x8000, scoped, tag = 'input window, operand 0, single buffered']
    #allocation6 [shape = 's32[1]{0}', space=sflag, size = 0x4, scoped, tag = 'scoped memory for tpu_custom_call.1']
    #allocation7 [shape = 's32[1]{0}', space=sflag, size = 0x4, scoped, tag = 'scoped memory for tpu_custom_call.1']
    #allocation8 [shape = 'u8[393216]{0}', space=vmem, size = 0x60000, scoped, tag = 'input window, operand 1, single buffered']
    #allocation9 [shape = 's32[1]{0}', space=sflag, size = 0x4, scoped, tag = 'scoped memory for tpu_custom_call.1']
    #allocation10 [shape = 'u8[393216]{0}', space=vmem, size = 0x60000, scoped, tag = 'input window, operand 3, single buffered']
    #allocation11 [shape = 'u8[131072]{0}', space=vmem, size = 0x20000, scoped, tag = 'input window, operand 5, single buffered']
    #allocation12 [shape = 's32[1]{0}', space=sflag, size = 0x4, scoped, tag = 'scoped memory for tpu_custom_call.1']
    #allocation13 [shape = 'u8[16384]{0}', space=vmem, size = 0x4000, scoped, tag = 'output window, operand 0, single buffered']
    %12 = vsyncpa [#allocation6], 0
    %13 = vsyncpa [#allocation9], 0
    %14 = vsyncpa [#allocation12], 0
    %15 = vsyncpa [#allocation7], 0
    // Predicated region
    $region2: #{tpu_custom_call.1} parent=1 // pred_check
      _
    $region3: #{tpu_custom_call.1} parent=1 // pred_check_branch
      %17 = sbr.rel (0) target = $region5
    $region4: #{tpu_custom_call.1} parent=1 // pred_region
      %s19 = ssub.s32 1024, 1024
      %20 = vsyncadd [#allocation6], %s19
      %s21 = sshll.u32 [#allocation5], 4
      %s22 = int_to_ptr.vmem [resolvable:$true] %s21
      %27 = dma.hbm_to_vmem [thread:$0]  %s0, 1024, %s22, [#allocation6], 128, 128, 8
    $region5: #{tpu_custom_call.1} parent=1 // pred_fallthru
      _
    // Predicated region
    $region6: #{tpu_custom_call.1} parent=1 // pred_check
      _
    $region7: #{tpu_custom_call.1} parent=1 // pred_check_branch
      %29 = sbr.rel (0) target = $region9
    $region8: #{tpu_custom_call.1} parent=1 // pred_region
      %s31 = ssub.s32 12288, 12288
      %32 = vsyncadd [#allocation9], %s31
      %s33 = sshll.u32 [#allocation8], 4
      %s34 = int_to_ptr.vmem [resolvable:$true] %s33
      %39 = dma.hbm_to_vmem [thread:$0]  %s1, 12288, %s34, [#allocation9], 128, 128, 8
    $region9: #{tpu_custom_call.1} parent=1 // pred_fallthru
      _
    // Predicated region
    $region10: #{tpu_custom_call.1} parent=1 // pred_check
      _
    $region11: #{tpu_custom_call.1} parent=1 // pred_check_branch
      %41 = sbr.rel (0) target = $region13
    $region12: #{tpu_custom_call.1} parent=1 // pred_region
      _
    $region13: #{tpu_custom_call.1} parent=1 // pred_fallthru
      _
    // Predicated region
    $region14: #{tpu_custom_call.1} parent=1 // pred_check
      _
    $region15: #{tpu_custom_call.1} parent=1 // pred_check_branch
      %43 = sbr.rel (0) target = $region17
    $region16: #{tpu_custom_call.1} parent=1 // pred_region
      %s45 = ssub.s32 12288, 12288
      %46 = vsyncadd [#allocation9], %s45
      %s47 = sshll.u32 [#allocation10], 4
      %s48 = int_to_ptr.vmem [resolvable:$true] %s47
      %53 = dma.hbm_to_vmem [thread:$0]  %s3, 12288, %s48, [#allocation9], 128, 128, 8
    $region17: #{tpu_custom_call.1} parent=1 // pred_fallthru
      _
    // Predicated region
    $region18: #{tpu_custom_call.1} parent=1 // pred_check
      _
    $region19: #{tpu_custom_call.1} parent=1 // pred_check_branch
      %55 = sbr.rel (0) target = $region21
    $region20: #{tpu_custom_call.1} parent=1 // pred_region
      _
    $region21: #{tpu_custom_call.1} parent=1 // pred_fallthru
      _
    // Predicated region
    $region22: #{tpu_custom_call.1} parent=1 // pred_check
      _
    $region23: #{tpu_custom_call.1} parent=1 // pred_check_branch
      %57 = sbr.rel (0) target = $region25
    $region24: #{tpu_custom_call.1} parent=1 // pred_region
      %s59 = ssub.s32 4096, 4096
      %60 = vsyncadd [#allocation12], %s59
      %s61 = sshll.u32 [#allocation11], 4
      %s62 = int_to_ptr.vmem [resolvable:$true] %s61
      %67 = dma.hbm_to_vmem [thread:$0]  %s5, 4096, %s62, [#allocation12], 128, 128, 8
    $region25: #{tpu_custom_call.1} parent=1 // pred_fallthru
      _
    // Predicated region
    $region26: #{tpu_custom_call.1} parent=1 // pred_check
      _
    $region27: #{tpu_custom_call.1} parent=1 // pred_check_branch
      %69 = sbr.rel (0) target = $region29
    $region28: #{tpu_custom_call.1} parent=1 // pred_region
      _
    $region29: #{tpu_custom_call.1} parent=1 // pred_fallthru
      _
    // Predicated region
    $region30: #{tpu_custom_call.1} parent=1 // pred_check
      _
    $region31: #{tpu_custom_call.1} parent=1 // pred_check_branch
      %71 = sbr.rel (0) target = $region33
    $region32: #{tpu_custom_call.1} parent=1 // pred_region
      %72 = dma.done [#allocation6], 1024
    $region33: #{tpu_custom_call.1} parent=1 // pred_fallthru
      _
    // Predicated region
    $region34: #{tpu_custom_call.1} parent=1 // pred_check
      _
    $region35: #{tpu_custom_call.1} parent=1 // pred_check_branch
      %74 = sbr.rel (0) target = $region37
    $region36: #{tpu_custom_call.1} parent=1 // pred_region
      %75 = dma.done [#allocation9], 12288
    $region37: #{tpu_custom_call.1} parent=1 // pred_fallthru
      _
    // Predicated region
    $region38: #{tpu_custom_call.1} parent=1 // pred_check
      _
    $region39: #{tpu_custom_call.1} parent=1 // pred_check_branch
      %77 = sbr.rel (0) target = $region41
    $region40: #{tpu_custom_call.1} parent=1 // pred_region
      %78 = dma.done [#allocation9], 12288
    $region41: #{tpu_custom_call.1} parent=1 // pred_fallthru
      _
    // Predicated region
    $region42: #{tpu_custom_call.1} parent=1 // pred_check
      _
    $region43: #{tpu_custom_call.1} parent=1 // pred_check_branch
      %80 = sbr.rel (0) target = $region45
    $region44: #{tpu_custom_call.1} parent=1 // pred_region
      %81 = dma.done [#allocation12], 4096
    $region45: #{tpu_custom_call.1} parent=1 // pred_fallthru
      _
    %82 = vst [vmem:[#allocation2] sm:$0xff] 0.0
    %83 = vst [vmem:[#allocation2 + $0x8] sm:$0xff] 0.0
    %84 = vst [vmem:[#allocation2 + $0x20] sm:$0xff] 0.0
    %85 = vst [vmem:[#allocation2 + $0x28] sm:$0xff] 0.0
    %86 = vst [vmem:[#allocation3] sm:$0xff] 0.0
    %87 = vst [vmem:[#allocation3 + $0x8] sm:$0xff] 0.0
    %88 = vst [vmem:[#allocation3 + $0x20] sm:$0xff] 0.0
    %89 = vst [vmem:[#allocation3 + $0x28] sm:$0xff] 0.0
    %v90 = vld [vmem:[#allocation5 + $0xe] sm:$0xff]
    %v91 = vld [vmem:[#allocation5 + $0x16] sm:$0xff]
    %v92 = vld [vmem:[#allocation5 + $0x2e] sm:$0xff]
    %v93 = vld [vmem:[#allocation5 + $0x36] sm:$0xff]
    %94 = vst [vmem:[#allocation4] sm:$0xff] %v90
    %95 = vst [vmem:[#allocation4 + $0x18] sm:$0xff] %v91
    %96 = vst [vmem:[#allocation4 + $0x30] sm:$0xff] %v92
    %97 = vst [vmem:[#allocation4 + $0x48] sm:$0xff] %v93
    %v98 = vld [vmem:[#allocation5 + $0xf] sm:$0xff]
    %v99 = vld [vmem:[#allocation5 + $0x17] sm:$0xff]
    %v100 = vld [vmem:[#allocation5 + $0x2f] sm:$0xff]
    %v101 = vld [vmem:[#allocation5 + $0x37] sm:$0xff]
    %102 = vst [vmem:[#allocation4 + $0x8] sm:$0xff] %v98
    %103 = vst [vmem:[#allocation4 + $0x20] sm:$0xff] %v99
    %104 = vst [vmem:[#allocation4 + $0x38] sm:$0xff] %v100
    %105 = vst [vmem:[#allocation4 + $0x50] sm:$0xff] %v101
    %v106 = vld [vmem:[#allocation5 + $0x10] sm:$0xff]
    %v107 = vld [vmem:[#allocation5 + $0x18] sm:$0xff]
    %v108 = vld [vmem:[#allocation5 + $0x30] sm:$0xff]
    %v109 = vld [vmem:[#allocation5 + $0x38] sm:$0xff]
    %110 = vst [vmem:[#allocation4 + $0x10] sm:$0xff] %v106
    %111 = vst [vmem:[#allocation4 + $0x28] sm:$0xff] %v107
    %112 = vst [vmem:[#allocation4 + $0x40] sm:$0xff] %v108
    %113 = vst [vmem:[#allocation4 + $0x58] sm:$0xff] %v109
    %v114 = vld [vmem:[#allocation4] sm:$0xff]
    %v115 = vld [vmem:[#allocation4 + $0x8] sm:$0xff]
    %v116 = vld [vmem:[#allocation4 + $0x10] sm:$0xff]
    %v117 = vld [vmem:[#allocation4 + $0x18] sm:$0xff]
    %v118 = vld [vmem:[#allocation4 + $0x20] sm:$0xff]
    %v119 = vld [vmem:[#allocation4 + $0x28] sm:$0xff]
    %v120 = vld [vmem:[#allocation4 + $0x30] sm:$0xff]
    %v121 = vld [vmem:[#allocation4 + $0x38] sm:$0xff]
    %v122 = vld [vmem:[#allocation4 + $0x40] sm:$0xff]
    %v123 = vld [vmem:[#allocation4 + $0x48] sm:$0xff]
    %v124 = vld [vmem:[#allocation4 + $0x50] sm:$0xff]
    %v125 = vld [vmem:[#allocation4 + $0x58] sm:$0xff]
    %v126 = vld [vmem:[#allocation8] sm:$0xff]
    %v127 = vld [vmem:[#allocation8 + $0x8] sm:$0xff]
    %v128 = vld [vmem:[#allocation8 + $0x10] sm:$0xff]
    %v129 = vld [vmem:[#allocation8 + $0x18] sm:$0xff]
    %v130 = vld [vmem:[#allocation8 + $0x20] sm:$0xff]
    %v131 = vld [vmem:[#allocation8 + $0x28] sm:$0xff]
    %v132 = vld [vmem:[#allocation8 + $0x30] sm:$0xff]
    %v133 = vld [vmem:[#allocation8 + $0x38] sm:$0xff]
    %v134 = vld [vmem:[#allocation8 + $0x40] sm:$0xff]
    %v135 = vld [vmem:[#allocation8 + $0x48] sm:$0xff]
    %v136 = vld [vmem:[#allocation8 + $0x50] sm:$0xff]
    %v137 = vld [vmem:[#allocation8 + $0x58] sm:$0xff]
    %v138 = vld [vmem:[#allocation8 + $0x60] sm:$0xff]
    %v139 = vld [vmem:[#allocation8 + $0x68] sm:$0xff]
    %v140 = vld [vmem:[#allocation8 + $0x70] sm:$0xff]
    %v141 = vld [vmem:[#allocation8 + $0x78] sm:$0xff]
    %v142 = vld [vmem:[#allocation8 + $0x80] sm:$0xff]
    %v143 = vld [vmem:[#allocation8 + $0x88] sm:$0xff]
    %v144 = vld [vmem:[#allocation8 + $0x90] sm:$0xff]
    %v145 = vld [vmem:[#allocation8 + $0x98] sm:$0xff]
    %v146 = vld [vmem:[#allocation8 + $0xa0] sm:$0xff]
    %v147 = vld [vmem:[#allocation8 + $0xa8] sm:$0xff]
    %v148 = vld [vmem:[#allocation8 + $0xb0] sm:$0xff]
    %v149 = vld [vmem:[#allocation8 + $0xb8] sm:$0xff]
    %v150 = vld [vmem:[#allocation8 + $0xc0] sm:$0xff]
    %v151 = vld [vmem:[#allocation8 + $0xc8] sm:$0xff]
    %v152 = vld [vmem:[#allocation8 + $0xd0] sm:$0xff]
    %v153 = vld [vmem:[#allocation8 + $0xd8] sm:$0xff]
    %v154 = vld [vmem:[#allocation8 + $0xe0] sm:$0xff]
    %v155 = vld [vmem:[#allocation8 + $0xe8] sm:$0xff]
    %v156 = vld [vmem:[#allocation8 + $0xf0] sm:$0xff]
    %v157 = vld [vmem:[#allocation8 + $0xf8] sm:$0xff]
    %v158 = vld [vmem:[#allocation8 + $0x100] sm:$0xff]
    %v159 = vld [vmem:[#allocation8 + $0x108] sm:$0xff]
    %v160 = vld [vmem:[#allocation8 + $0x110] sm:$0xff]
    %v161 = vld [vmem:[#allocation8 + $0x118] sm:$0xff]
    %v162 = vld [vmem:[#allocation8 + $0x120] sm:$0xff]
    %v163 = vld [vmem:[#allocation8 + $0x128] sm:$0xff]
    %v164 = vld [vmem:[#allocation8 + $0x130] sm:$0xff]
    %v165 = vld [vmem:[#allocation8 + $0x138] sm:$0xff]
    %v166 = vld [vmem:[#allocation8 + $0x140] sm:$0xff]
    %v167 = vld [vmem:[#allocation8 + $0x148] sm:$0xff]
    %v168 = vld [vmem:[#allocation8 + $0x150] sm:$0xff]
    %v169 = vld [vmem:[#allocation8 + $0x158] sm:$0xff]
    %v170 = vld [vmem:[#allocation8 + $0x160] sm:$0xff]
    %v171 = vld [vmem:[#allocation8 + $0x168] sm:$0xff]
    %v172 = vld [vmem:[#allocation8 + $0x170] sm:$0xff]
    %v173 = vld [vmem:[#allocation8 + $0x178] sm:$0xff]
    %v174 = vld [vmem:[%s2] sm:$0x1]
    %v176 = vlaneseq
    %v177 = vshrl.u32 %v176, 7
    %v178 = vsub.s32 0, %v177
    %v179 = vrot.slane %v174, %v178
    %181 = vmatprep.subr.mxu0 0.0
    %182 = vmatpush1.msra.mxu0 %v126
    %183 = vmatprep.subr.mxu0 0.0
    %184 = vmatpush1.msra.mxu0 %v127
    %185 = vmatprep.subr.mxu0 0.0
    %186 = vmatpush1.msra.mxu0 %v128
    %187 = vmatprep.subr.mxu0 0.0
    %188 = vmatpush1.msra.mxu0 %v129
    %189 = vmatprep.subr.mxu0 0.0
    %190 = vmatpush1.msra.mxu0 %v130
    %191 = vmatprep.subr.mxu0 0.0
    %192 = vmatpush1.msra.mxu0 %v131
    %193 = vmatprep.subr.mxu0 0.0
    %194 = vmatpush1.msra.mxu0 %v132
    %195 = vmatprep.subr.mxu0 0.0
    %196 = vmatpush1.msra.mxu0 %v133
    %197 = vmatprep.subr.mxu0 0.0
    %198 = vmatpush1.msra.mxu0 %v134
    %199 = vmatprep.subr.mxu0 0.0
    %200 = vmatpush1.msra.mxu0 %v135
    %201 = vmatprep.subr.mxu0 0.0
    %202 = vmatpush1.msra.mxu0 %v136
    %203 = vmatprep.subr.mxu0 0.0
    %204 = vmatpush1.msra.mxu0 %v137
    %205 = vmatprep.subr.mxu0 0.0
    %206 = vmatpush1.msra.mxu0 %v138
    %207 = vmatprep.subr.mxu0 0.0
    %208 = vmatpush1.msra.mxu0 %v139
    %209 = vmatprep.subr.mxu0 0.0
    %210 = vmatpush1.msra.mxu0 %v140
    %211 = vmatprep.subr.mxu0 0.0
    %212 = vmatpush1.msra.mxu0 %v141
    %213 = vmatprep.subr.mxu0 0.0
    %214 = vmatpush1.msra.mxu0 %v142
    %215 = vmatprep.subr.mxu0 0.0
    %216 = vmatpush1.msra.mxu0 %v143
    %217 = vmatprep.subr.mxu0 0.0
    %218 = vmatpush1.msra.mxu0 %v144
    %219 = vmatprep.subr.mxu0 0.0
    %220 = vmatpush1.msra.mxu0 %v145
    %221 = vmatprep.subr.mxu0 0.0
    %222 = vmatpush1.msra.mxu0 %v146
    %223 = vmatprep.subr.mxu0 0.0
    %224 = vmatpush1.msra.mxu0 %v147
    %225 = vmatprep.subr.mxu0 0.0
    %226 = vmatpush1.msra.mxu0 %v148
    %227 = vmatprep.subr.mxu0 0.0
    %228 = vmatpush1.msra.mxu0 %v149
    %229 = vmatprep.subr.mxu0 0.0
    %230 = vmatpush1.msra.mxu0 %v150
    %231 = vmatprep.subr.mxu0 0.0
    %232 = vmatpush1.msra.mxu0 %v151
    %233 = vmatprep.subr.mxu0 0.0
    %234 = vmatpush1.msra.mxu0 %v152
    %235 = vmatprep.subr.mxu0 0.0
    %236 = vmatpush1.msra.mxu0 %v153
    %237 = vmatprep.subr.mxu0 0.0
    %238 = vmatpush1.msra.mxu0 %v154
    %239 = vmatprep.subr.mxu0 0.0
    %240 = vmatpush1.msra.mxu0 %v155
    %241 = vmatprep.subr.mxu0 0.0
    %242 = vmatpush1.msra.mxu0 %v156
    %243 = vmatprep.subr.mxu0 0.0
    %244 = vmatpush1.msra.mxu0 %v157
    %245 = vmatprep.mubr.f32.mxu0 %v115
    %246 = vmatmul.mubr.f32.gmra.mrb[0].mxu0 %v114
    %v247 = vpop.f32.mrb[0].mxu0
    %v248 = vadd.f32 %v179, %v247
    %v249 = vpop.f32.mrb[0].mxu0
    %250 = vmatprep.mubr.f32.mxu0 %v118
    %251 = vmatmul.mubr.f32.gmra.mrb[0].mxu0 %v117
    %v252 = vpop.f32.mrb[0].mxu0
    %v253 = vadd.f32 %v179, %v252
    %v254 = vpop.f32.mrb[0].mxu0
    %255 = vmatprep.mubr.f32.mxu0 %v121
    %256 = vmatmul.mubr.f32.gmra.mrb[0].mxu0 %v120
    %v257 = vpop.f32.mrb[0].mxu0
    %v258 = vadd.f32 %v179, %v257
    %v259 = vpop.f32.mrb[0].mxu0
    %260 = vmatprep.mubr.f32.mxu0 %v124
    %261 = vmatmul.mubr.f32.gmra.mrb[0].mxu0 %v123
    %v262 = vpop.f32.mrb[0].mxu0
    %v263 = vadd.f32 %v179, %v262
    %v264 = vpop.f32.mrb[0].mxu0
    %265 = vdwg.mxu0
    %266 = vmatprep.subr.mxu0 0.0
    %267 = vmatpush1.msra.mxu0 %v158
    %268 = vmatprep.subr.mxu0 0.0
    %269 = vmatpush1.msra.mxu0 %v159
    %270 = vmatprep.subr.mxu0 0.0
    %271 = vmatpush1.msra.mxu0 %v160
    %272 = vmatprep.subr.mxu0 0.0
    %273 = vmatpush1.msra.mxu0 %v161
    %274 = vmatprep.subr.mxu0 0.0
    %275 = vmatpush1.msra.mxu0 %v162
    %276 = vmatprep.subr.mxu0 0.0
    %277 = vmatpush1.msra.mxu0 %v163
    %278 = vmatprep.subr.mxu0 0.0
    %279 = vmatpush1.msra.mxu0 %v164
    %280 = vmatprep.subr.mxu0 0.0
    %281 = vmatpush1.msra.mxu0 %v165
    %282 = vmatprep.subr.mxu0 0.0
    %283 = vmatpush1.msra.mxu0 %v166
    %284 = vmatprep.subr.mxu0 0.0
    %285 = vmatpush1.msra.mxu0 %v167
    %286 = vmatprep.subr.mxu0 0.0
    %287 = vmatpush1.msra.mxu0 %v168
    %288 = vmatprep.subr.mxu0 0.0
    %289 = vmatpush1.msra.mxu0 %v169
    %290 = vmatprep.subr.mxu0 0.0
    %291 = vmatpush1.msra.mxu0 %v170
    %292 = vmatprep.subr.mxu0 0.0
    %293 = vmatpush1.msra.mxu0 %v171
    %294 = vmatprep.subr.mxu0 0.0
    %295 = vmatpush1.msra.mxu0 %v172
    %296 = vmatprep.subr.mxu0 0.0
    %297 = vmatpush1.msra.mxu0 %v173
    %298 = vmatprep.subr.mxu0 0.0
    %299 = vmatpush1.msra.mxu0 0.0
    %300 = vmatprep.subr.mxu0 0.0
    %301 = vmatpush1.msra.mxu0 0.0
    %302 = vmatprep.subr.mxu0 0.0
    %303 = vmatpush1.msra.mxu0 0.0
    %304 = vmatprep.subr.mxu0 0.0
    %305 = vmatpush1.msra.mxu0 0.0
    %306 = vmatprep.subr.mxu0 0.0
    %307 = vmatpush1.msra.mxu0 0.0
    %308 = vmatprep.subr.mxu0 0.0
    %309 = vmatpush1.msra.mxu0 0.0
    %310 = vmatprep.subr.mxu0 0.0
    %311 = vmatpush1.msra.mxu0 0.0
    %312 = vmatprep.subr.mxu0 0.0
    %313 = vmatpush1.msra.mxu0 0.0
    %314 = vmatprep.subr.mxu0 0.0
    %315 = vmatpush1.msra.mxu0 0.0
    %316 = vmatprep.subr.mxu0 0.0
    %317 = vmatpush1.msra.mxu0 0.0
    %318 = vmatprep.subr.mxu0 0.0
    %319 = vmatpush1.msra.mxu0 0.0
    %320 = vmatprep.subr.mxu0 0.0
    %321 = vmatpush1.msra.mxu0 0.0
    %322 = vmatprep.subr.mxu0 0.0
    %323 = vmatpush1.msra.mxu0 0.0
    %324 = vmatprep.subr.mxu0 0.0
    %325 = vmatpush1.msra.mxu0 0.0
    %326 = vmatprep.subr.mxu0 0.0
    %327 = vmatpush1.msra.mxu0 0.0
    %328 = vmatprep.subr.mxu0 0.0
    %329 = vmatpush1.msra.mxu0 0.0
    %330 = vmatprep.mubr.f32.mxu0 0.0
    %331 = vmatmul.mubr.f32.gmra.mrb[0].mxu0 %v116
    %v332 = vpop.f32.mrb[0].mxu0
    %v333 = vadd.f32 %v248, %v332
    %v334 = vpop.f32.mrb[0].mxu0
    %335 = vmatprep.mubr.f32.mxu0 0.0
    %336 = vmatmul.mubr.f32.gmra.mrb[0].mxu0 %v119
    %v337 = vpop.f32.mrb[0].mxu0
    %v338 = vadd.f32 %v253, %v337
    %v339 = vpop.f32.mrb[0].mxu0
    %340 = vmatprep.mubr.f32.mxu0 0.0
    %341 = vmatmul.mubr.f32.gmra.mrb[0].mxu0 %v122
    %v342 = vpop.f32.mrb[0].mxu0
    %v343 = vadd.f32 %v258, %v342
    %v344 = vpop.f32.mrb[0].mxu0
    %345 = vmatprep.mubr.f32.mxu0 0.0
    %346 = vmatmul.mubr.f32.gmra.mrb[0].mxu0 %v125
    %v347 = vpop.f32.mrb[0].mxu0
    %v348 = vadd.f32 %v263, %v347
    %v349 = vpop.f32.mrb[0].mxu0
    %350 = vdwg.mxu0
    %v351 = vmax.f32 %v333, 0.0
    %v352 = vmax.f32 %v338, 0.0
    %v353 = vmax.f32 %v343, 0.0
    %v354 = vmax.f32 %v348, 0.0
    %355 = vst [vmem:[#allocation3 + $0x10] sm:$0xff] %v351
    %356 = vst [vmem:[#allocation3 + $0x18] sm:$0xff] %v352
    %357 = vst [vmem:[#allocation3 + $0x30] sm:$0xff] %v353
    %358 = vst [vmem:[#allocation3 + $0x38] sm:$0xff] %v354
    %v359 = vld [vmem:[#allocation3 + $0xe] sm:$0xff]
    %v360 = vld [vmem:[#allocation3 + $0x16] sm:$0xff]
    %v361 = vld [vmem:[#allocation3 + $0x2e] sm:$0xff]
    %v362 = vld [vmem:[#allocation3 + $0x36] sm:$0xff]
    %363 = vst [vmem:[#allocation4] sm:$0xff] %v359
    %364 = vst [vmem:[#allocation4 + $0x18] sm:$0xff] %v360
    %365 = vst [vmem:[#allocation4 + $0x30] sm:$0xff] %v361
    %366 = vst [vmem:[#allocation4 + $0x48] sm:$0xff] %v362
    %v367 = vld [vmem:[#allocation3 + $0xf] sm:$0xff]
    %v368 = vld [vmem:[#allocation3 + $0x17] sm:$0xff]
    %v369 = vld [vmem:[#allocation3 + $0x2f] sm:$0xff]
    %v370 = vld [vmem:[#allocation3 + $0x37] sm:$0xff]
    %371 = vst [vmem:[#allocation4 + $0x8] sm:$0xff] %v367
    %372 = vst [vmem:[#allocation4 + $0x20] sm:$0xff] %v368
    %373 = vst [vmem:[#allocation4 + $0x38] sm:$0xff] %v369
    %374 = vst [vmem:[#allocation4 + $0x50] sm:$0xff] %v370
    %v375 = vld [vmem:[#allocation3 + $0x10] sm:$0xff]
    %v376 = vld [vmem:[#allocation3 + $0x18] sm:$0xff]
    %v377 = vld [vmem:[#allocation3 + $0x30] sm:$0xff]
    %v378 = vld [vmem:[#allocation3 + $0x38] sm:$0xff]
    %379 = vst [vmem:[#allocation4 + $0x10] sm:$0xff] %v375
    %380 = vst [vmem:[#allocation4 + $0x28] sm:$0xff] %v376
    %381 = vst [vmem:[#allocation4 + $0x40] sm:$0xff] %v377
    %382 = vst [vmem:[#allocation4 + $0x58] sm:$0xff] %v378
    %v383 = vld [vmem:[#allocation4] sm:$0xff]
    %v384 = vld [vmem:[#allocation4 + $0x8] sm:$0xff]
    %v385 = vld [vmem:[#allocation4 + $0x10] sm:$0xff]
    %v386 = vld [vmem:[#allocation4 + $0x18] sm:$0xff]
    %v387 = vld [vmem:[#allocation4 + $0x20] sm:$0xff]
    %v388 = vld [vmem:[#allocation4 + $0x28] sm:$0xff]
    %v389 = vld [vmem:[#allocation4 + $0x30] sm:$0xff]
    %v390 = vld [vmem:[#allocation4 + $0x38] sm:$0xff]
    %v391 = vld [vmem:[#allocation4 + $0x40] sm:$0xff]
    %v392 = vld [vmem:[#allocation4 + $0x48] sm:$0xff]
    %v393 = vld [vmem:[#allocation4 + $0x50] sm:$0xff]
    %v394 = vld [vmem:[#allocation4 + $0x58] sm:$0xff]
    %v395 = vld [vmem:[#allocation10] sm:$0xff]
    %v396 = vld [vmem:[#allocation10 + $0x8] sm:$0xff]
    %v397 = vld [vmem:[#allocation10 + $0x10] sm:$0xff]
    %v398 = vld [vmem:[#allocation10 + $0x18] sm:$0xff]
    %v399 = vld [vmem:[#allocation10 + $0x20] sm:$0xff]
    %v400 = vld [vmem:[#allocation10 + $0x28] sm:$0xff]
    %v401 = vld [vmem:[#allocation10 + $0x30] sm:$0xff]
    %v402 = vld [vmem:[#allocation10 + $0x38] sm:$0xff]
    %v403 = vld [vmem:[#allocation10 + $0x40] sm:$0xff]
    %v404 = vld [vmem:[#allocation10 + $0x48] sm:$0xff]
    %v405 = vld [vmem:[#allocation10 + $0x50] sm:$0xff]
    %v406 = vld [vmem:[#allocation10 + $0x58] sm:$0xff]
    %v407 = vld [vmem:[#allocation10 + $0x60] sm:$0xff]
    %v408 = vld [vmem:[#allocation10 + $0x68] sm:$0xff]
    %v409 = vld [vmem:[#allocation10 + $0x70] sm:$0xff]
    %v410 = vld [vmem:[#allocation10 + $0x78] sm:$0xff]
    %v411 = vld [vmem:[#allocation10 + $0x80] sm:$0xff]
    %v412 = vld [vmem:[#allocation10 + $0x88] sm:$0xff]
    %v413 = vld [vmem:[#allocation10 + $0x90] sm:$0xff]
    %v414 = vld [vmem:[#allocation10 + $0x98] sm:$0xff]
    %v415 = vld [vmem:[#allocation10 + $0xa0] sm:$0xff]
    %v416 = vld [vmem:[#allocation10 + $0xa8] sm:$0xff]
    %v417 = vld [vmem:[#allocation10 + $0xb0] sm:$0xff]
    %v418 = vld [vmem:[#allocation10 + $0xb8] sm:$0xff]
    %v419 = vld [vmem:[#allocation10 + $0xc0] sm:$0xff]
    %v420 = vld [vmem:[#allocation10 + $0xc8] sm:$0xff]
    %v421 = vld [vmem:[#allocation10 + $0xd0] sm:$0xff]
    %v422 = vld [vmem:[#allocation10 + $0xd8] sm:$0xff]
    %v423 = vld [vmem:[#allocation10 + $0xe0] sm:$0xff]
    %v424 = vld [vmem:[#allocation10 + $0xe8] sm:$0xff]
    %v425 = vld [vmem:[#allocation10 + $0xf0] sm:$0xff]
    %v426 = vld [vmem:[#allocation10 + $0xf8] sm:$0xff]
    %v427 = vld [vmem:[#allocation10 + $0x100] sm:$0xff]
    %v428 = vld [vmem:[#allocation10 + $0x108] sm:$0xff]
    %v429 = vld [vmem:[#allocation10 + $0x110] sm:$0xff]
    %v430 = vld [vmem:[#allocation10 + $0x118] sm:$0xff]
    %v431 = vld [vmem:[#allocation10 + $0x120] sm:$0xff]
    %v432 = vld [vmem:[#allocation10 + $0x128] sm:$0xff]
    %v433 = vld [vmem:[#allocation10 + $0x130] sm:$0xff]
    %v434 = vld [vmem:[#allocation10 + $0x138] sm:$0xff]
    %v435 = vld [vmem:[#allocation10 + $0x140] sm:$0xff]
    %v436 = vld [vmem:[#allocation10 + $0x148] sm:$0xff]
    %v437 = vld [vmem:[#allocation10 + $0x150] sm:$0xff]
    %v438 = vld [vmem:[#allocation10 + $0x158] sm:$0xff]
    %v439 = vld [vmem:[#allocation10 + $0x160] sm:$0xff]
    %v440 = vld [vmem:[#allocation10 + $0x168] sm:$0xff]
    %v441 = vld [vmem:[#allocation10 + $0x170] sm:$0xff]
    %v442 = vld [vmem:[#allocation10 + $0x178] sm:$0xff]
    %v443 = vld [vmem:[%s4] sm:$0x1]
    %v445 = vlaneseq
    %v446 = vshrl.u32 %v445, 7
    %v447 = vsub.s32 0, %v446
    %v448 = vrot.slane %v443, %v447
    %450 = vmatprep.subr.mxu0 0.0
    %451 = vmatpush1.msra.mxu0 %v395
    %452 = vmatprep.subr.mxu0 0.0
    %453 = vmatpush1.msra.mxu0 %v396
    %454 = vmatprep.subr.mxu0 0.0
    %455 = vmatpush1.msra.mxu0 %v397
    %456 = vmatprep.subr.mxu0 0.0
    %457 = vmatpush1.msra.mxu0 %v398
    %458 = vmatprep.subr.mxu0 0.0
    %459 = vmatpush1.msra.mxu0 %v399
    %460 = vmatprep.subr.mxu0 0.0
    %461 = vmatpush1.msra.mxu0 %v400
    %462 = vmatprep.subr.mxu0 0.0
    %463 = vmatpush1.msra.mxu0 %v401
    %464 = vmatprep.subr.mxu0 0.0
    %465 = vmatpush1.msra.mxu0 %v402
    %466 = vmatprep.subr.mxu0 0.0
    %467 = vmatpush1.msra.mxu0 %v403
    %468 = vmatprep.subr.mxu0 0.0
    %469 = vmatpush1.msra.mxu0 %v404
    %470 = vmatprep.subr.mxu0 0.0
    %471 = vmatpush1.msra.mxu0 %v405
    %472 = vmatprep.subr.mxu0 0.0
    %473 = vmatpush1.msra.mxu0 %v406
    %474 = vmatprep.subr.mxu0 0.0
    %475 = vmatpush1.msra.mxu0 %v407
    %476 = vmatprep.subr.mxu0 0.0
    %477 = vmatpush1.msra.mxu0 %v408
    %478 = vmatprep.subr.mxu0 0.0
    %479 = vmatpush1.msra.mxu0 %v409
    %480 = vmatprep.subr.mxu0 0.0
    %481 = vmatpush1.msra.mxu0 %v410
    %482 = vmatprep.subr.mxu0 0.0
    %483 = vmatpush1.msra.mxu0 %v411
    %484 = vmatprep.subr.mxu0 0.0
    %485 = vmatpush1.msra.mxu0 %v412
    %486 = vmatprep.subr.mxu0 0.0
    %487 = vmatpush1.msra.mxu0 %v413
    %488 = vmatprep.subr.mxu0 0.0
    %489 = vmatpush1.msra.mxu0 %v414
    %490 = vmatprep.subr.mxu0 0.0
    %491 = vmatpush1.msra.mxu0 %v415
    %492 = vmatprep.subr.mxu0 0.0
    %493 = vmatpush1.msra.mxu0 %v416
    %494 = vmatprep.subr.mxu0 0.0
    %495 = vmatpush1.msra.mxu0 %v417
    %496 = vmatprep.subr.mxu0 0.0
    %497 = vmatpush1.msra.mxu0 %v418
    %498 = vmatprep.subr.mxu0 0.0
    %499 = vmatpush1.msra.mxu0 %v419
    %500 = vmatprep.subr.mxu0 0.0
    %501 = vmatpush1.msra.mxu0 %v420
    %502 = vmatprep.subr.mxu0 0.0
    %503 = vmatpush1.msra.mxu0 %v421
    %504 = vmatprep.subr.mxu0 0.0
    %505 = vmatpush1.msra.mxu0 %v422
    %506 = vmatprep.subr.mxu0 0.0
    %507 = vmatpush1.msra.mxu0 %v423
    %508 = vmatprep.subr.mxu0 0.0
    %509 = vmatpush1.msra.mxu0 %v424
    %510 = vmatprep.subr.mxu0 0.0
    %511 = vmatpush1.msra.mxu0 %v425
    %512 = vmatprep.subr.mxu0 0.0
    %513 = vmatpush1.msra.mxu0 %v426
    %514 = vmatprep.mubr.f32.mxu0 %v384
    %515 = vmatmul.mubr.f32.gmra.mrb[0].mxu0 %v383
    %v516 = vpop.f32.mrb[0].mxu0
    %v517 = vadd.f32 %v448, %v516
    %v518 = vpop.f32.mrb[0].mxu0
    %519 = vmatprep.mubr.f32.mxu0 %v387
    %520 = vmatmul.mubr.f32.gmra.mrb[0].mxu0 %v386
    %v521 = vpop.f32.mrb[0].mxu0
    %v522 = vadd.f32 %v448, %v521
    %v523 = vpop.f32.mrb[0].mxu0
    %524 = vmatprep.mubr.f32.mxu0 %v390
    %525 = vmatmul.mubr.f32.gmra.mrb[0].mxu0 %v389
    %v526 = vpop.f32.mrb[0].mxu0
    %v527 = vadd.f32 %v448, %v526
    %v528 = vpop.f32.mrb[0].mxu0
    %529 = vmatprep.mubr.f32.mxu0 %v393
    %530 = vmatmul.mubr.f32.gmra.mrb[0].mxu0 %v392
    %v531 = vpop.f32.mrb[0].mxu0
    %v532 = vadd.f32 %v448, %v531
    %v533 = vpop.f32.mrb[0].mxu0
    %534 = vdwg.mxu0
    %535 = vmatprep.subr.mxu0 0.0
    %536 = vmatpush1.msra.mxu0 %v427
    %537 = vmatprep.subr.mxu0 0.0
    %538 = vmatpush1.msra.mxu0 %v428
    %539 = vmatprep.subr.mxu0 0.0
    %540 = vmatpush1.msra.mxu0 %v429
    %541 = vmatprep.subr.mxu0 0.0
    %542 = vmatpush1.msra.mxu0 %v430
    %543 = vmatprep.subr.mxu0 0.0
    %544 = vmatpush1.msra.mxu0 %v431
    %545 = vmatprep.subr.mxu0 0.0
    %546 = vmatpush1.msra.mxu0 %v432
    %547 = vmatprep.subr.mxu0 0.0
    %548 = vmatpush1.msra.mxu0 %v433
    %549 = vmatprep.subr.mxu0 0.0
    %550 = vmatpush1.msra.mxu0 %v434
    %551 = vmatprep.subr.mxu0 0.0
    %552 = vmatpush1.msra.mxu0 %v435
    %553 = vmatprep.subr.mxu0 0.0
    %554 = vmatpush1.msra.mxu0 %v436
    %555 = vmatprep.subr.mxu0 0.0
    %556 = vmatpush1.msra.mxu0 %v437
    %557 = vmatprep.subr.mxu0 0.0
    %558 = vmatpush1.msra.mxu0 %v438
    %559 = vmatprep.subr.mxu0 0.0
    %560 = vmatpush1.msra.mxu0 %v439
    %561 = vmatprep.subr.mxu0 0.0
    %562 = vmatpush1.msra.mxu0 %v440
    %563 = vmatprep.subr.mxu0 0.0
    %564 = vmatpush1.msra.mxu0 %v441
    %565 = vmatprep.subr.mxu0 0.0
    %566 = vmatpush1.msra.mxu0 %v442
    %567 = vmatprep.subr.mxu0 0.0
    %568 = vmatpush1.msra.mxu0 0.0
    %569 = vmatprep.subr.mxu0 0.0
    %570 = vmatpush1.msra.mxu0 0.0
    %571 = vmatprep.subr.mxu0 0.0
    %572 = vmatpush1.msra.mxu0 0.0
    %573 = vmatprep.subr.mxu0 0.0
    %574 = vmatpush1.msra.mxu0 0.0
    %575 = vmatprep.subr.mxu0 0.0
    %576 = vmatpush1.msra.mxu0 0.0
    %577 = vmatprep.subr.mxu0 0.0
    %578 = vmatpush1.msra.mxu0 0.0
    %579 = vmatprep.subr.mxu0 0.0
    %580 = vmatpush1.msra.mxu0 0.0
    %581 = vmatprep.subr.mxu0 0.0
    %582 = vmatpush1.msra.mxu0 0.0
    %583 = vmatprep.subr.mxu0 0.0
    %584 = vmatpush1.msra.mxu0 0.0
    %585 = vmatprep.subr.mxu0 0.0
    %586 = vmatpush1.msra.mxu0 0.0
    %587 = vmatprep.subr.mxu0 0.0
    %588 = vmatpush1.msra.mxu0 0.0
    %589 = vmatprep.subr.mxu0 0.0
    %590 = vmatpush1.msra.mxu0 0.0
    %591 = vmatprep.subr.mxu0 0.0
    %592 = vmatpush1.msra.mxu0 0.0
    %593 = vmatprep.subr.mxu0 0.0
    %594 = vmatpush1.msra.mxu0 0.0
    %595 = vmatprep.subr.mxu0 0.0
    %596 = vmatpush1.msra.mxu0 0.0
    %597 = vmatprep.subr.mxu0 0.0
    %598 = vmatpush1.msra.mxu0 0.0
    %599 = vmatprep.mubr.f32.mxu0 0.0
    %600 = vmatmul.mubr.f32.gmra.mrb[0].mxu0 %v385
    %v601 = vpop.f32.mrb[0].mxu0
    %v602 = vadd.f32 %v517, %v601
    %v603 = vpop.f32.mrb[0].mxu0
    %604 = vmatprep.mubr.f32.mxu0 0.0
    %605 = vmatmul.mubr.f32.gmra.mrb[0].mxu0 %v388
    %v606 = vpop.f32.mrb[0].mxu0
    %v607 = vadd.f32 %v522, %v606
    %v608 = vpop.f32.mrb[0].mxu0
    %609 = vmatprep.mubr.f32.mxu0 0.0
    %610 = vmatmul.mubr.f32.gmra.mrb[0].mxu0 %v391
    %v611 = vpop.f32.mrb[0].mxu0
    %v612 = vadd.f32 %v527, %v611
    %v613 = vpop.f32.mrb[0].mxu0
    %614 = vmatprep.mubr.f32.mxu0 0.0
    %615 = vmatmul.mubr.f32.gmra.mrb[0].mxu0 %v394
    %v616 = vpop.f32.mrb[0].mxu0
    %v617 = vadd.f32 %v532, %v616
    %v618 = vpop.f32.mrb[0].mxu0
    %619 = vdwg.mxu0
    %v620 = vmax.f32 %v602, 0.0
    %v621 = vmax.f32 %v607, 0.0
    %v622 = vmax.f32 %v612, 0.0
    %v623 = vmax.f32 %v617, 0.0
    %v624 = vld [vmem:[#allocation5 + $0x10] sm:$0xff]
    %v625 = vld [vmem:[#allocation5 + $0x18] sm:$0xff]
    %v626 = vld [vmem:[#allocation5 + $0x30] sm:$0xff]
    %v627 = vld [vmem:[#allocation5 + $0x38] sm:$0xff]
    %v628 = vld [vmem:[#allocation11] sm:$0xff]
    %v629 = vld [vmem:[#allocation11 + $0x8] sm:$0xff]
    %v630 = vld [vmem:[#allocation11 + $0x10] sm:$0xff]
    %v631 = vld [vmem:[#allocation11 + $0x18] sm:$0xff]
    %v632 = vld [vmem:[#allocation11 + $0x20] sm:$0xff]
    %v633 = vld [vmem:[#allocation11 + $0x28] sm:$0xff]
    %v634 = vld [vmem:[#allocation11 + $0x30] sm:$0xff]
    %v635 = vld [vmem:[#allocation11 + $0x38] sm:$0xff]
    %v636 = vld [vmem:[#allocation11 + $0x40] sm:$0xff]
    %v637 = vld [vmem:[#allocation11 + $0x48] sm:$0xff]
    %v638 = vld [vmem:[#allocation11 + $0x50] sm:$0xff]
    %v639 = vld [vmem:[#allocation11 + $0x58] sm:$0xff]
    %v640 = vld [vmem:[#allocation11 + $0x60] sm:$0xff]
    %v641 = vld [vmem:[#allocation11 + $0x68] sm:$0xff]
    %v642 = vld [vmem:[#allocation11 + $0x70] sm:$0xff]
    %v643 = vld [vmem:[#allocation11 + $0x78] sm:$0xff]
    %v644 = vld [vmem:[%s6] sm:$0x1]
    %v646 = vlaneseq
    %v647 = vshrl.u32 %v646, 7
    %v648 = vsub.s32 0, %v647
    %v649 = vrot.slane %v644, %v648
    %651 = vmatprep.subr.mxu0 0.0
    %652 = vmatpush1.msra.mxu0 %v628
    %653 = vmatprep.subr.mxu0 0.0
    %654 = vmatpush1.msra.mxu0 %v629
    %655 = vmatprep.subr.mxu0 0.0
    %656 = vmatpush1.msra.mxu0 %v630
    %657 = vmatprep.subr.mxu0 0.0
    %658 = vmatpush1.msra.mxu0 %v631
    %659 = vmatprep.subr.mxu0 0.0
    %660 = vmatpush1.msra.mxu0 %v632
    %661 = vmatprep.subr.mxu0 0.0
    %662 = vmatpush1.msra.mxu0 %v633
    %663 = vmatprep.subr.mxu0 0.0
    %664 = vmatpush1.msra.mxu0 %v634
    %665 = vmatprep.subr.mxu0 0.0
    %666 = vmatpush1.msra.mxu0 %v635
    %667 = vmatprep.subr.mxu0 0.0
    %668 = vmatpush1.msra.mxu0 %v636
    %669 = vmatprep.subr.mxu0 0.0
    %670 = vmatpush1.msra.mxu0 %v637
    %671 = vmatprep.subr.mxu0 0.0
    %672 = vmatpush1.msra.mxu0 %v638
    %673 = vmatprep.subr.mxu0 0.0
    %674 = vmatpush1.msra.mxu0 %v639
    %675 = vmatprep.subr.mxu0 0.0
    %676 = vmatpush1.msra.mxu0 %v640
    %677 = vmatprep.subr.mxu0 0.0
    %678 = vmatpush1.msra.mxu0 %v641
    %679 = vmatprep.subr.mxu0 0.0
    %680 = vmatpush1.msra.mxu0 %v642
    %681 = vmatprep.subr.mxu0 0.0
    %682 = vmatpush1.msra.mxu0 %v643
    %683 = vmatprep.subr.mxu0 0.0
    %684 = vmatpush1.msra.mxu0 0.0
    %685 = vmatprep.subr.mxu0 0.0
    %686 = vmatpush1.msra.mxu0 0.0
    %687 = vmatprep.subr.mxu0 0.0
    %688 = vmatpush1.msra.mxu0 0.0
    %689 = vmatprep.subr.mxu0 0.0
    %690 = vmatpush1.msra.mxu0 0.0
    %691 = vmatprep.subr.mxu0 0.0
    %692 = vmatpush1.msra.mxu0 0.0
    %693 = vmatprep.subr.mxu0 0.0
    %694 = vmatpush1.msra.mxu0 0.0
    %695 = vmatprep.subr.mxu0 0.0
    %696 = vmatpush1.msra.mxu0 0.0
    %697 = vmatprep.subr.mxu0 0.0
    %698 = vmatpush1.msra.mxu0 0.0
    %699 = vmatprep.subr.mxu0 0.0
    %700 = vmatpush1.msra.mxu0 0.0
    %701 = vmatprep.subr.mxu0 0.0
    %702 = vmatpush1.msra.mxu0 0.0
    %703 = vmatprep.subr.mxu0 0.0
    %704 = vmatpush1.msra.mxu0 0.0
    %705 = vmatprep.subr.mxu0 0.0
    %706 = vmatpush1.msra.mxu0 0.0
    %707 = vmatprep.subr.mxu0 0.0
    %708 = vmatpush1.msra.mxu0 0.0
    %709 = vmatprep.subr.mxu0 0.0
    %710 = vmatpush1.msra.mxu0 0.0
    %711 = vmatprep.subr.mxu0 0.0
    %712 = vmatpush1.msra.mxu0 0.0
    %713 = vmatprep.subr.mxu0 0.0
    %714 = vmatpush1.msra.mxu0 0.0
    %715 = vmatprep.mubr.f32.mxu0 0.0
    %716 = vmatmul.mubr.f32.gmra.mrb[0].mxu0 %v624
    %v717 = vpop.f32.mrb[0].mxu0
    %v718 = vadd.f32 %v649, %v717
    %v719 = vpop.f32.mrb[0].mxu0
    %720 = vmatprep.mubr.f32.mxu0 0.0
    %721 = vmatmul.mubr.f32.gmra.mrb[0].mxu0 %v625
    %v722 = vpop.f32.mrb[0].mxu0
    %v723 = vadd.f32 %v649, %v722
    %v724 = vpop.f32.mrb[0].mxu0
    %725 = vmatprep.mubr.f32.mxu0 0.0
    %726 = vmatmul.mubr.f32.gmra.mrb[0].mxu0 %v626
    %v727 = vpop.f32.mrb[0].mxu0
    %v728 = vadd.f32 %v649, %v727
    %v729 = vpop.f32.mrb[0].mxu0
    %730 = vmatprep.mubr.f32.mxu0 0.0
    %731 = vmatmul.mubr.f32.gmra.mrb[0].mxu0 %v627
    %v732 = vpop.f32.mrb[0].mxu0
    %v733 = vadd.f32 %v649, %v732
    %v734 = vpop.f32.mrb[0].mxu0
    %735 = vdwg.mxu0
    %v736 = vadd.f32 %v620, %v718
    %v737 = vadd.f32 %v621, %v723
    %v738 = vadd.f32 %v622, %v728
    %v739 = vadd.f32 %v623, %v733
    %v740 = vmax.f32 %v736, 0.0
    %v741 = vmax.f32 %v737, 0.0
    %v742 = vmax.f32 %v738, 0.0
    %v743 = vmax.f32 %v739, 0.0
    %744 = vst [vmem:[#allocation2 + $0x10] sm:$0xff] %v740
    %745 = vst [vmem:[#allocation2 + $0x18] sm:$0xff] %v741
    %746 = vst [vmem:[#allocation2 + $0x30] sm:$0xff] %v742
    %747 = vst [vmem:[#allocation2 + $0x38] sm:$0xff] %v743
    %v748 = vld [vmem:[#allocation2 + $0xc] sm:$0xff]
    %v749 = vld [vmem:[#allocation2 + $0x14] sm:$0xff]
    %v750 = vld [vmem:[#allocation2 + $0x2c] sm:$0xff]
    %v751 = vld [vmem:[#allocation2 + $0x34] sm:$0xff]
    %752 = vst [vmem:[#allocation4] sm:$0xff] %v748
    %753 = vst [vmem:[#allocation4 + $0x18] sm:$0xff] %v749
    %754 = vst [vmem:[#allocation4 + $0x30] sm:$0xff] %v750
    %755 = vst [vmem:[#allocation4 + $0x48] sm:$0xff] %v751
    %v756 = vld [vmem:[#allocation2 + $0xe] sm:$0xff]
    %v757 = vld [vmem:[#allocation2 + $0x16] sm:$0xff]
    %v758 = vld [vmem:[#allocation2 + $0x2e] sm:$0xff]
    %v759 = vld [vmem:[#allocation2 + $0x36] sm:$0xff]
    %760 = vst [vmem:[#allocation4 + $0x8] sm:$0xff] %v756
    %761 = vst [vmem:[#allocation4 + $0x20] sm:$0xff] %v757
    %762 = vst [vmem:[#allocation4 + $0x38] sm:$0xff] %v758
    %763 = vst [vmem:[#allocation4 + $0x50] sm:$0xff] %v759
    %v764 = vld [vmem:[#allocation2 + $0x10] sm:$0xff]
    %v765 = vld [vmem:[#allocation2 + $0x18] sm:$0xff]
    %v766 = vld [vmem:[#allocation2 + $0x30] sm:$0xff]
    %v767 = vld [vmem:[#allocation2 + $0x38] sm:$0xff]
    %768 = vst [vmem:[#allocation4 + $0x10] sm:$0xff] %v764
    %769 = vst [vmem:[#allocation4 + $0x28] sm:$0xff] %v765
    %770 = vst [vmem:[#allocation4 + $0x40] sm:$0xff] %v766
    %771 = vst [vmem:[#allocation4 + $0x58] sm:$0xff] %v767
    %v772 = vld [vmem:[#allocation4] sm:$0xff]
    %v773 = vld [vmem:[#allocation4 + $0x8] sm:$0xff]
    %v774 = vld [vmem:[#allocation4 + $0x10] sm:$0xff]
    %v775 = vld [vmem:[#allocation4 + $0x18] sm:$0xff]
    %v776 = vld [vmem:[#allocation4 + $0x20] sm:$0xff]
    %v777 = vld [vmem:[#allocation4 + $0x28] sm:$0xff]
    %v778 = vld [vmem:[#allocation4 + $0x30] sm:$0xff]
    %v779 = vld [vmem:[#allocation4 + $0x38] sm:$0xff]
    %v780 = vld [vmem:[#allocation4 + $0x40] sm:$0xff]
    %v781 = vld [vmem:[#allocation4 + $0x48] sm:$0xff]
    %v782 = vld [vmem:[#allocation4 + $0x50] sm:$0xff]
    %v783 = vld [vmem:[#allocation4 + $0x58] sm:$0xff]
    %s784 = scalar_lea.vmem [#allocation8], 384
    %v785 = vld [vmem:[%s784] sm:$0xff]
    %v786 = vld [vmem:[%s784 + $0x8] sm:$0xff]
    %v787 = vld [vmem:[%s784 + $0x10] sm:$0xff]
    %v788 = vld [vmem:[%s784 + $0x18] sm:$0xff]
    %v789 = vld [vmem:[%s784 + $0x20] sm:$0xff]
    %v790 = vld [vmem:[%s784 + $0x28] sm:$0xff]
    %v791 = vld [vmem:[%s784 + $0x30] sm:$0xff]
    %v792 = vld [vmem:[%s784 + $0x38] sm:$0xff]
    %v793 = vld [vmem:[%s784 + $0x40] sm:$0xff]
    %v794 = vld [vmem:[%s784 + $0x48] sm:$0xff]
    %v795 = vld [vmem:[%s784 + $0x50] sm:$0xff]
    %v796 = vld [vmem:[%s784 + $0x58] sm:$0xff]
    %v797 = vld [vmem:[%s784 + $0x60] sm:$0xff]
    %v798 = vld [vmem:[%s784 + $0x68] sm:$0xff]
    %v799 = vld [vmem:[%s784 + $0x70] sm:$0xff]
    %v800 = vld [vmem:[%s784 + $0x78] sm:$0xff]
    %v801 = vld [vmem:[%s784 + $0x80] sm:$0xff]
    %v802 = vld [vmem:[%s784 + $0x88] sm:$0xff]
    %v803 = vld [vmem:[%s784 + $0x90] sm:$0xff]
    %v804 = vld [vmem:[%s784 + $0x98] sm:$0xff]
    %v805 = vld [vmem:[%s784 + $0xa0] sm:$0xff]
    %v806 = vld [vmem:[%s784 + $0xa8] sm:$0xff]
    %v807 = vld [vmem:[%s784 + $0xb0] sm:$0xff]
    %v808 = vld [vmem:[%s784 + $0xb8] sm:$0xff]
    %v809 = vld [vmem:[%s784 + $0xc0] sm:$0xff]
    %v810 = vld [vmem:[%s784 + $0xc8] sm:$0xff]
    %v811 = vld [vmem:[%s784 + $0xd0] sm:$0xff]
    %v812 = vld [vmem:[%s784 + $0xd8] sm:$0xff]
    %v813 = vld [vmem:[%s784 + $0xe0] sm:$0xff]
    %v814 = vld [vmem:[%s784 + $0xe8] sm:$0xff]
    %v815 = vld [vmem:[%s784 + $0xf0] sm:$0xff]
    %v816 = vld [vmem:[%s784 + $0xf8] sm:$0xff]
    %v817 = vld [vmem:[%s784 + $0x100] sm:$0xff]
    %v818 = vld [vmem:[%s784 + $0x108] sm:$0xff]
    %v819 = vld [vmem:[%s784 + $0x110] sm:$0xff]
    %v820 = vld [vmem:[%s784 + $0x118] sm:$0xff]
    %v821 = vld [vmem:[%s784 + $0x120] sm:$0xff]
    %v822 = vld [vmem:[%s784 + $0x128] sm:$0xff]
    %v823 = vld [vmem:[%s784 + $0x130] sm:$0xff]
    %v824 = vld [vmem:[%s784 + $0x138] sm:$0xff]
    %v825 = vld [vmem:[%s784 + $0x140] sm:$0xff]
    %v826 = vld [vmem:[%s784 + $0x148] sm:$0xff]
    %v827 = vld [vmem:[%s784 + $0x150] sm:$0xff]
    %v828 = vld [vmem:[%s784 + $0x158] sm:$0xff]
    %v829 = vld [vmem:[%s784 + $0x160] sm:$0xff]
    %v830 = vld [vmem:[%s784 + $0x168] sm:$0xff]
    %v831 = vld [vmem:[%s784 + $0x170] sm:$0xff]
    %v832 = vld [vmem:[%s784 + $0x178] sm:$0xff]
    %s833 = scalar_lea.vmem %s2, 1
    %v834 = vld [vmem:[%s833] sm:$0x1]
    %v836 = vlaneseq
    %v837 = vshrl.u32 %v836, 7
    %v838 = vsub.s32 0, %v837
    %v839 = vrot.slane %v834, %v838
    %841 = vmatprep.subr.mxu0 0.0
    %842 = vmatpush1.msra.mxu0 %v785
    %843 = vmatprep.subr.mxu0 0.0
    %844 = vmatpush1.msra.mxu0 %v786
    %845 = vmatprep.subr.mxu0 0.0
    %846 = vmatpush1.msra.mxu0 %v787
    %847 = vmatprep.subr.mxu0 0.0
    %848 = vmatpush1.msra.mxu0 %v788
    %849 = vmatprep.subr.mxu0 0.0
    %850 = vmatpush1.msra.mxu0 %v789
    %851 = vmatprep.subr.mxu0 0.0
    %852 = vmatpush1.msra.mxu0 %v790
    %853 = vmatprep.subr.mxu0 0.0
    %854 = vmatpush1.msra.mxu0 %v791
    %855 = vmatprep.subr.mxu0 0.0
    %856 = vmatpush1.msra.mxu0 %v792
    %857 = vmatprep.subr.mxu0 0.0
    %858 = vmatpush1.msra.mxu0 %v793
    %859 = vmatprep.subr.mxu0 0.0
    %860 = vmatpush1.msra.mxu0 %v794
    %861 = vmatprep.subr.mxu0 0.0
    %862 = vmatpush1.msra.mxu0 %v795
    %863 = vmatprep.subr.mxu0 0.0
    %864 = vmatpush1.msra.mxu0 %v796
    %865 = vmatprep.subr.mxu0 0.0
    %866 = vmatpush1.msra.mxu0 %v797
    %867 = vmatprep.subr.mxu0 0.0
    %868 = vmatpush1.msra.mxu0 %v798
    %869 = vmatprep.subr.mxu0 0.0
    %870 = vmatpush1.msra.mxu0 %v799
    %871 = vmatprep.subr.mxu0 0.0
    %872 = vmatpush1.msra.mxu0 %v800
    %873 = vmatprep.subr.mxu0 0.0
    %874 = vmatpush1.msra.mxu0 %v801
    %875 = vmatprep.subr.mxu0 0.0
    %876 = vmatpush1.msra.mxu0 %v802
    %877 = vmatprep.subr.mxu0 0.0
    %878 = vmatpush1.msra.mxu0 %v803
    %879 = vmatprep.subr.mxu0 0.0
    %880 = vmatpush1.msra.mxu0 %v804
    %881 = vmatprep.subr.mxu0 0.0
    %882 = vmatpush1.msra.mxu0 %v805
    %883 = vmatprep.subr.mxu0 0.0
    %884 = vmatpush1.msra.mxu0 %v806
    %885 = vmatprep.subr.mxu0 0.0
    %886 = vmatpush1.msra.mxu0 %v807
    %887 = vmatprep.subr.mxu0 0.0
    %888 = vmatpush1.msra.mxu0 %v808
    %889 = vmatprep.subr.mxu0 0.0
    %890 = vmatpush1.msra.mxu0 %v809
    %891 = vmatprep.subr.mxu0 0.0
    %892 = vmatpush1.msra.mxu0 %v810
    %893 = vmatprep.subr.mxu0 0.0
    %894 = vmatpush1.msra.mxu0 %v811
    %895 = vmatprep.subr.mxu0 0.0
    %896 = vmatpush1.msra.mxu0 %v812
    %897 = vmatprep.subr.mxu0 0.0
    %898 = vmatpush1.msra.mxu0 %v813
    %899 = vmatprep.subr.mxu0 0.0
    %900 = vmatpush1.msra.mxu0 %v814
    %901 = vmatprep.subr.mxu0 0.0
    %902 = vmatpush1.msra.mxu0 %v815
    %903 = vmatprep.subr.mxu0 0.0
    %904 = vmatpush1.msra.mxu0 %v816
    %905 = vmatprep.mubr.f32.mxu0 %v773
    %906 = vmatmul.mubr.f32.gmra.mrb[0].mxu0 %v772
    %v907 = vpop.f32.mrb[0].mxu0
    %v908 = vadd.f32 %v839, %v907
    %v909 = vpop.f32.mrb[0].mxu0
    %910 = vmatprep.mubr.f32.mxu0 %v776
    %911 = vmatmul.mubr.f32.gmra.mrb[0].mxu0 %v775
    %v912 = vpop.f32.mrb[0].mxu0
    %v913 = vadd.f32 %v839, %v912
    %v914 = vpop.f32.mrb[0].mxu0
    %915 = vmatprep.mubr.f32.mxu0 %v779
    %916 = vmatmul.mubr.f32.gmra.mrb[0].mxu0 %v778
    %v917 = vpop.f32.mrb[0].mxu0
    %v918 = vadd.f32 %v839, %v917
    %v919 = vpop.f32.mrb[0].mxu0
    %920 = vmatprep.mubr.f32.mxu0 %v782
    %921 = vmatmul.mubr.f32.gmra.mrb[0].mxu0 %v781
    %v922 = vpop.f32.mrb[0].mxu0
    %v923 = vadd.f32 %v839, %v922
    %v924 = vpop.f32.mrb[0].mxu0
    %925 = vdwg.mxu0
    %926 = vmatprep.subr.mxu0 0.0
    %927 = vmatpush1.msra.mxu0 %v817
    %928 = vmatprep.subr.mxu0 0.0
    %929 = vmatpush1.msra.mxu0 %v818
    %930 = vmatprep.subr.mxu0 0.0
    %931 = vmatpush1.msra.mxu0 %v819
    %932 = vmatprep.subr.mxu0 0.0
    %933 = vmatpush1.msra.mxu0 %v820
    %934 = vmatprep.subr.mxu0 0.0
    %935 = vmatpush1.msra.mxu0 %v821
    %936 = vmatprep.subr.mxu0 0.0
    %937 = vmatpush1.msra.mxu0 %v822
    %938 = vmatprep.subr.mxu0 0.0
    %939 = vmatpush1.msra.mxu0 %v823
    %940 = vmatprep.subr.mxu0 0.0
    %941 = vmatpush1.msra.mxu0 %v824
    %942 = vmatprep.subr.mxu0 0.0
    %943 = vmatpush1.msra.mxu0 %v825
    %944 = vmatprep.subr.mxu0 0.0
    %945 = vmatpush1.msra.mxu0 %v826
    %946 = vmatprep.subr.mxu0 0.0
    %947 = vmatpush1.msra.mxu0 %v827
    %948 = vmatprep.subr.mxu0 0.0
    %949 = vmatpush1.msra.mxu0 %v828
    %950 = vmatprep.subr.mxu0 0.0
    %951 = vmatpush1.msra.mxu0 %v829
    %952 = vmatprep.subr.mxu0 0.0
    %953 = vmatpush1.msra.mxu0 %v830
    %954 = vmatprep.subr.mxu0 0.0
    %955 = vmatpush1.msra.mxu0 %v831
    %956 = vmatprep.subr.mxu0 0.0
    %957 = vmatpush1.msra.mxu0 %v832
    %958 = vmatprep.subr.mxu0 0.0
    %959 = vmatpush1.msra.mxu0 0.0
    %960 = vmatprep.subr.mxu0 0.0
    %961 = vmatpush1.msra.mxu0 0.0
    %962 = vmatprep.subr.mxu0 0.0
    %963 = vmatpush1.msra.mxu0 0.0
    %964 = vmatprep.subr.mxu0 0.0
    %965 = vmatpush1.msra.mxu0 0.0
    %966 = vmatprep.subr.mxu0 0.0
    %967 = vmatpush1.msra.mxu0 0.0
    %968 = vmatprep.subr.mxu0 0.0
    %969 = vmatpush1.msra.mxu0 0.0
    %970 = vmatprep.subr.mxu0 0.0
    %971 = vmatpush1.msra.mxu0 0.0
    %972 = vmatprep.subr.mxu0 0.0
    %973 = vmatpush1.msra.mxu0 0.0
    %974 = vmatprep.subr.mxu0 0.0
    %975 = vmatpush1.msra.mxu0 0.0
    %976 = vmatprep.subr.mxu0 0.0
    %977 = vmatpush1.msra.mxu0 0.0
    %978 = vmatprep.subr.mxu0 0.0
    %979 = vmatpush1.msra.mxu0 0.0
    %980 = vmatprep.subr.mxu0 0.0
    %981 = vmatpush1.msra.mxu0 0.0
    %982 = vmatprep.subr.mxu0 0.0
    %983 = vmatpush1.msra.mxu0 0.0
    %984 = vmatprep.subr.mxu0 0.0
    %985 = vmatpush1.msra.mxu0 0.0
    %986 = vmatprep.subr.mxu0 0.0
    %987 = vmatpush1.msra.mxu0 0.0
    %988 = vmatprep.subr.mxu0 0.0
    %989 = vmatpush1.msra.mxu0 0.0
    %990 = vmatprep.mubr.f32.mxu0 0.0
    %991 = vmatmul.mubr.f32.gmra.mrb[0].mxu0 %v774
    %v992 = vpop.f32.mrb[0].mxu0
    %v993 = vadd.f32 %v908, %v992
    %v994 = vpop.f32.mrb[0].mxu0
    %995 = vmatprep.mubr.f32.mxu0 0.0
    %996 = vmatmul.mubr.f32.gmra.mrb[0].mxu0 %v777
    %v997 = vpop.f32.mrb[0].mxu0
    %v998 = vadd.f32 %v913, %v997
    %v999 = vpop.f32.mrb[0].mxu0
    %1000 = vmatprep.mubr.f32.mxu0 0.0
    %1001 = vmatmul.mubr.f32.gmra.mrb[0].mxu0 %v780
    %v1002 = vpop.f32.mrb[0].mxu0
    %v1003 = vadd.f32 %v918, %v1002
    %v1004 = vpop.f32.mrb[0].mxu0
    %1005 = vmatprep.mubr.f32.mxu0 0.0
    %1006 = vmatmul.mubr.f32.gmra.mrb[0].mxu0 %v783
    %v1007 = vpop.f32.mrb[0].mxu0
    %v1008 = vadd.f32 %v923, %v1007
    %v1009 = vpop.f32.mrb[0].mxu0
    %1010 = vdwg.mxu0
    %v1011 = vmax.f32 %v993, 0.0
    %v1012 = vmax.f32 %v998, 0.0
    %v1013 = vmax.f32 %v1003, 0.0
    %v1014 = vmax.f32 %v1008, 0.0
    %1015 = vst [vmem:[#allocation3 + $0x10] sm:$0xff] %v1011
    %1016 = vst [vmem:[#allocation3 + $0x18] sm:$0xff] %v1012
    %1017 = vst [vmem:[#allocation3 + $0x30] sm:$0xff] %v1013
    %1018 = vst [vmem:[#allocation3 + $0x38] sm:$0xff] %v1014
    %v1019 = vld [vmem:[#allocation3 + $0xc] sm:$0xff]
    %v1020 = vld [vmem:[#allocation3 + $0x14] sm:$0xff]
    %v1021 = vld [vmem:[#allocation3 + $0x2c] sm:$0xff]
    %v1022 = vld [vmem:[#allocation3 + $0x34] sm:$0xff]
    %1023 = vst [vmem:[#allocation4] sm:$0xff] %v1019
    %1024 = vst [vmem:[#allocation4 + $0x18] sm:$0xff] %v1020
    %1025 = vst [vmem:[#allocation4 + $0x30] sm:$0xff] %v1021
    %1026 = vst [vmem:[#allocation4 + $0x48] sm:$0xff] %v1022
    %v1027 = vld [vmem:[#allocation3 + $0xe] sm:$0xff]
    %v1028 = vld [vmem:[#allocation3 + $0x16] sm:$0xff]
    %v1029 = vld [vmem:[#allocation3 + $0x2e] sm:$0xff]
    %v1030 = vld [vmem:[#allocation3 + $0x36] sm:$0xff]
    %1031 = vst [vmem:[#allocation4 + $0x8] sm:$0xff] %v1027
    %1032 = vst [vmem:[#allocation4 + $0x20] sm:$0xff] %v1028
    %1033 = vst [vmem:[#allocation4 + $0x38] sm:$0xff] %v1029
    %1034 = vst [vmem:[#allocation4 + $0x50] sm:$0xff] %v1030
    %v1035 = vld [vmem:[#allocation3 + $0x10] sm:$0xff]
    %v1036 = vld [vmem:[#allocation3 + $0x18] sm:$0xff]
    %v1037 = vld [vmem:[#allocation3 + $0x30] sm:$0xff]
    %v1038 = vld [vmem:[#allocation3 + $0x38] sm:$0xff]
    %1039 = vst [vmem:[#allocation4 + $0x10] sm:$0xff] %v1035
    %1040 = vst [vmem:[#allocation4 + $0x28] sm:$0xff] %v1036
    %1041 = vst [vmem:[#allocation4 + $0x40] sm:$0xff] %v1037
    %1042 = vst [vmem:[#allocation4 + $0x58] sm:$0xff] %v1038
    %v1043 = vld [vmem:[#allocation4] sm:$0xff]
    %v1044 = vld [vmem:[#allocation4 + $0x8] sm:$0xff]
    %v1045 = vld [vmem:[#allocation4 + $0x10] sm:$0xff]
    %v1046 = vld [vmem:[#allocation4 + $0x18] sm:$0xff]
    %v1047 = vld [vmem:[#allocation4 + $0x20] sm:$0xff]
    %v1048 = vld [vmem:[#allocation4 + $0x28] sm:$0xff]
    %v1049 = vld [vmem:[#allocation4 + $0x30] sm:$0xff]
    %v1050 = vld [vmem:[#allocation4 + $0x38] sm:$0xff]
    %v1051 = vld [vmem:[#allocation4 + $0x40] sm:$0xff]
    %v1052 = vld [vmem:[#allocation4 + $0x48] sm:$0xff]
    %v1053 = vld [vmem:[#allocation4 + $0x50] sm:$0xff]
    %v1054 = vld [vmem:[#allocation4 + $0x58] sm:$0xff]
    %s1055 = scalar_lea.vmem [#allocation10], 384
    %v1056 = vld [vmem:[%s1055] sm:$0xff]
    %v1057 = vld [vmem:[%s1055 + $0x8] sm:$0xff]
    %v1058 = vld [vmem:[%s1055 + $0x10] sm:$0xff]
    %v1059 = vld [vmem:[%s1055 + $0x18] sm:$0xff]
    %v1060 = vld [vmem:[%s1055 + $0x20] sm:$0xff]
    %v1061 = vld [vmem:[%s1055 + $0x28] sm:$0xff]
    %v1062 = vld [vmem:[%s1055 + $0x30] sm:$0xff]
    %v1063 = vld [vmem:[%s1055 + $0x38] sm:$0xff]
    %v1064 = vld [vmem:[%s1055 + $0x40] sm:$0xff]
    %v1065 = vld [vmem:[%s1055 + $0x48] sm:$0xff]
    %v1066 = vld [vmem:[%s1055 + $0x50] sm:$0xff]
    %v1067 = vld [vmem:[%s1055 + $0x58] sm:$0xff]
    %v1068 = vld [vmem:[%s1055 + $0x60] sm:$0xff]
    %v1069 = vld [vmem:[%s1055 + $0x68] sm:$0xff]
    %v1070 = vld [vmem:[%s1055 + $0x70] sm:$0xff]
    %v1071 = vld [vmem:[%s1055 + $0x78] sm:$0xff]
    %v1072 = vld [vmem:[%s1055 + $0x80] sm:$0xff]
    %v1073 = vld [vmem:[%s1055 + $0x88] sm:$0xff]
    %v1074 = vld [vmem:[%s1055 + $0x90] sm:$0xff]
    %v1075 = vld [vmem:[%s1055 + $0x98] sm:$0xff]
    %v1076 = vld [vmem:[%s1055 + $0xa0] sm:$0xff]
    %v1077 = vld [vmem:[%s1055 + $0xa8] sm:$0xff]
    %v1078 = vld [vmem:[%s1055 + $0xb0] sm:$0xff]
    %v1079 = vld [vmem:[%s1055 + $0xb8] sm:$0xff]
    %v1080 = vld [vmem:[%s1055 + $0xc0] sm:$0xff]
    %v1081 = vld [vmem:[%s1055 + $0xc8] sm:$0xff]
    %v1082 = vld [vmem:[%s1055 + $0xd0] sm:$0xff]
    %v1083 = vld [vmem:[%s1055 + $0xd8] sm:$0xff]
    %v1084 = vld [vmem:[%s1055 + $0xe0] sm:$0xff]
    %v1085 = vld [vmem:[%s1055 + $0xe8] sm:$0xff]
    %v1086 = vld [vmem:[%s1055 + $0xf0] sm:$0xff]
    %v1087 = vld [vmem:[%s1055 + $0xf8] sm:$0xff]
    %v1088 = vld [vmem:[%s1055 + $0x100] sm:$0xff]
    %v1089 = vld [vmem:[%s1055 + $0x108] sm:$0xff]
    %v1090 = vld [vmem:[%s1055 + $0x110] sm:$0xff]
    %v1091 = vld [vmem:[%s1055 + $0x118] sm:$0xff]
    %v1092 = vld [vmem:[%s1055 + $0x120] sm:$0xff]
    %v1093 = vld [vmem:[%s1055 + $0x128] sm:$0xff]
    %v1094 = vld [vmem:[%s1055 + $0x130] sm:$0xff]
    %v1095 = vld [vmem:[%s1055 + $0x138] sm:$0xff]
    %v1096 = vld [vmem:[%s1055 + $0x140] sm:$0xff]
    %v1097 = vld [vmem:[%s1055 + $0x148] sm:$0xff]
    %v1098 = vld [vmem:[%s1055 + $0x150] sm:$0xff]
    %v1099 = vld [vmem:[%s1055 + $0x158] sm:$0xff]
    %v1100 = vld [vmem:[%s1055 + $0x160] sm:$0xff]
    %v1101 = vld [vmem:[%s1055 + $0x168] sm:$0xff]
    %v1102 = vld [vmem:[%s1055 + $0x170] sm:$0xff]
    %v1103 = vld [vmem:[%s1055 + $0x178] sm:$0xff]
    %s1104 = scalar_lea.vmem %s4, 1
    %v1105 = vld [vmem:[%s1104] sm:$0x1]
    %v1107 = vlaneseq
    %v1108 = vshrl.u32 %v1107, 7
    %v1109 = vsub.s32 0, %v1108
    %v1110 = vrot.slane %v1105, %v1109
    %1112 = vmatprep.subr.mxu0 0.0
    %1113 = vmatpush1.msra.mxu0 %v1056
    %1114 = vmatprep.subr.mxu0 0.0
    %1115 = vmatpush1.msra.mxu0 %v1057
    %1116 = vmatprep.subr.mxu0 0.0
    %1117 = vmatpush1.msra.mxu0 %v1058
    %1118 = vmatprep.subr.mxu0 0.0
    %1119 = vmatpush1.msra.mxu0 %v1059
    %1120 = vmatprep.subr.mxu0 0.0
    %1121 = vmatpush1.msra.mxu0 %v1060
    %1122 = vmatprep.subr.mxu0 0.0
    %1123 = vmatpush1.msra.mxu0 %v1061
    %1124 = vmatprep.subr.mxu0 0.0
    %1125 = vmatpush1.msra.mxu0 %v1062
    %1126 = vmatprep.subr.mxu0 0.0
    %1127 = vmatpush1.msra.mxu0 %v1063
    %1128 = vmatprep.subr.mxu0 0.0
    %1129 = vmatpush1.msra.mxu0 %v1064
    %1130 = vmatprep.subr.mxu0 0.0
    %1131 = vmatpush1.msra.mxu0 %v1065
    %1132 = vmatprep.subr.mxu0 0.0
    %1133 = vmatpush1.msra.mxu0 %v1066
    %1134 = vmatprep.subr.mxu0 0.0
    %1135 = vmatpush1.msra.mxu0 %v1067
    %1136 = vmatprep.subr.mxu0 0.0
    %1137 = vmatpush1.msra.mxu0 %v1068
    %1138 = vmatprep.subr.mxu0 0.0
    %1139 = vmatpush1.msra.mxu0 %v1069
    %1140 = vmatprep.subr.mxu0 0.0
    %1141 = vmatpush1.msra.mxu0 %v1070
    %1142 = vmatprep.subr.mxu0 0.0
    %1143 = vmatpush1.msra.mxu0 %v1071
    %1144 = vmatprep.subr.mxu0 0.0
    %1145 = vmatpush1.msra.mxu0 %v1072
    %1146 = vmatprep.subr.mxu0 0.0
    %1147 = vmatpush1.msra.mxu0 %v1073
    %1148 = vmatprep.subr.mxu0 0.0
    %1149 = vmatpush1.msra.mxu0 %v1074
    %1150 = vmatprep.subr.mxu0 0.0
    %1151 = vmatpush1.msra.mxu0 %v1075
    %1152 = vmatprep.subr.mxu0 0.0
    %1153 = vmatpush1.msra.mxu0 %v1076
    %1154 = vmatprep.subr.mxu0 0.0
    %1155 = vmatpush1.msra.mxu0 %v1077
    %1156 = vmatprep.subr.mxu0 0.0
    %1157 = vmatpush1.msra.mxu0 %v1078
    %1158 = vmatprep.subr.mxu0 0.0
    %1159 = vmatpush1.msra.mxu0 %v1079
    %1160 = vmatprep.subr.mxu0 0.0
    %1161 = vmatpush1.msra.mxu0 %v1080
    %1162 = vmatprep.subr.mxu0 0.0
    %1163 = vmatpush1.msra.mxu0 %v1081
    %1164 = vmatprep.subr.mxu0 0.0
    %1165 = vmatpush1.msra.mxu0 %v1082
    %1166 = vmatprep.subr.mxu0 0.0
    %1167 = vmatpush1.msra.mxu0 %v1083
    %1168 = vmatprep.subr.mxu0 0.0
    %1169 = vmatpush1.msra.mxu0 %v1084
    %1170 = vmatprep.subr.mxu0 0.0
    %1171 = vmatpush1.msra.mxu0 %v1085
    %1172 = vmatprep.subr.mxu0 0.0
    %1173 = vmatpush1.msra.mxu0 %v1086
    %1174 = vmatprep.subr.mxu0 0.0
    %1175 = vmatpush1.msra.mxu0 %v1087
    %1176 = vmatprep.mubr.f32.mxu0 %v1044
    %1177 = vmatmul.mubr.f32.gmra.mrb[0].mxu0 %v1043
    %v1178 = vpop.f32.mrb[0].mxu0
    %v1179 = vadd.f32 %v1110, %v1178
    %v1180 = vpop.f32.mrb[0].mxu0
    %1181 = vmatprep.mubr.f32.mxu0 %v1047
    %1182 = vmatmul.mubr.f32.gmra.mrb[0].mxu0 %v1046
    %v1183 = vpop.f32.mrb[0].mxu0
    %v1184 = vadd.f32 %v1110, %v1183
    %v1185 = vpop.f32.mrb[0].mxu0
    %1186 = vmatprep.mubr.f32.mxu0 %v1050
    %1187 = vmatmul.mubr.f32.gmra.mrb[0].mxu0 %v1049
    %v1188 = vpop.f32.mrb[0].mxu0
    %v1189 = vadd.f32 %v1110, %v1188
    %v1190 = vpop.f32.mrb[0].mxu0
    %1191 = vmatprep.mubr.f32.mxu0 %v1053
    %1192 = vmatmul.mubr.f32.gmra.mrb[0].mxu0 %v1052
    %v1193 = vpop.f32.mrb[0].mxu0
    %v1194 = vadd.f32 %v1110, %v1193
    %v1195 = vpop.f32.mrb[0].mxu0
    %1196 = vdwg.mxu0
    %1197 = vmatprep.subr.mxu0 0.0
    %1198 = vmatpush1.msra.mxu0 %v1088
    %1199 = vmatprep.subr.mxu0 0.0
    %1200 = vmatpush1.msra.mxu0 %v1089
    %1201 = vmatprep.subr.mxu0 0.0
    %1202 = vmatpush1.msra.mxu0 %v1090
    %1203 = vmatprep.subr.mxu0 0.0
    %1204 = vmatpush1.msra.mxu0 %v1091
    %1205 = vmatprep.subr.mxu0 0.0
    %1206 = vmatpush1.msra.mxu0 %v1092
    %1207 = vmatprep.subr.mxu0 0.0
    %1208 = vmatpush1.msra.mxu0 %v1093
    %1209 = vmatprep.subr.mxu0 0.0
    %1210 = vmatpush1.msra.mxu0 %v1094
    %1211 = vmatprep.subr.mxu0 0.0
    %1212 = vmatpush1.msra.mxu0 %v1095
    %1213 = vmatprep.subr.mxu0 0.0
    %1214 = vmatpush1.msra.mxu0 %v1096
    %1215 = vmatprep.subr.mxu0 0.0
    %1216 = vmatpush1.msra.mxu0 %v1097
    %1217 = vmatprep.subr.mxu0 0.0
    %1218 = vmatpush1.msra.mxu0 %v1098
    %1219 = vmatprep.subr.mxu0 0.0
    %1220 = vmatpush1.msra.mxu0 %v1099
    %1221 = vmatprep.subr.mxu0 0.0
    %1222 = vmatpush1.msra.mxu0 %v1100
    %1223 = vmatprep.subr.mxu0 0.0
    %1224 = vmatpush1.msra.mxu0 %v1101
    %1225 = vmatprep.subr.mxu0 0.0
    %1226 = vmatpush1.msra.mxu0 %v1102
    %1227 = vmatprep.subr.mxu0 0.0
    %1228 = vmatpush1.msra.mxu0 %v1103
    %1229 = vmatprep.subr.mxu0 0.0
    %1230 = vmatpush1.msra.mxu0 0.0
    %1231 = vmatprep.subr.mxu0 0.0
    %1232 = vmatpush1.msra.mxu0 0.0
    %1233 = vmatprep.subr.mxu0 0.0
    %1234 = vmatpush1.msra.mxu0 0.0
    %1235 = vmatprep.subr.mxu0 0.0
    %1236 = vmatpush1.msra.mxu0 0.0
    %1237 = vmatprep.subr.mxu0 0.0
    %1238 = vmatpush1.msra.mxu0 0.0
    %1239 = vmatprep.subr.mxu0 0.0
    %1240 = vmatpush1.msra.mxu0 0.0
    %1241 = vmatprep.subr.mxu0 0.0
    %1242 = vmatpush1.msra.mxu0 0.0
    %1243 = vmatprep.subr.mxu0 0.0
    %1244 = vmatpush1.msra.mxu0 0.0
    %1245 = vmatprep.subr.mxu0 0.0
    %1246 = vmatpush1.msra.mxu0 0.0
    %1247 = vmatprep.subr.mxu0 0.0
    %1248 = vmatpush1.msra.mxu0 0.0
    %1249 = vmatprep.subr.mxu0 0.0
    %1250 = vmatpush1.msra.mxu0 0.0
    %1251 = vmatprep.subr.mxu0 0.0
    %1252 = vmatpush1.msra.mxu0 0.0
    %1253 = vmatprep.subr.mxu0 0.0
    %1254 = vmatpush1.msra.mxu0 0.0
    %1255 = vmatprep.subr.mxu0 0.0
    %1256 = vmatpush1.msra.mxu0 0.0
    %1257 = vmatprep.subr.mxu0 0.0
    %1258 = vmatpush1.msra.mxu0 0.0
    %1259 = vmatprep.subr.mxu0 0.0
    %1260 = vmatpush1.msra.mxu0 0.0
    %1261 = vmatprep.mubr.f32.mxu0 0.0
    %1262 = vmatmul.mubr.f32.gmra.mrb[0].mxu0 %v1045
    %v1263 = vpop.f32.mrb[0].mxu0
    %v1264 = vadd.f32 %v1179, %v1263
    %v1265 = vpop.f32.mrb[0].mxu0
    %1266 = vmatprep.mubr.f32.mxu0 0.0
    %1267 = vmatmul.mubr.f32.gmra.mrb[0].mxu0 %v1048
    %v1268 = vpop.f32.mrb[0].mxu0
    %v1269 = vadd.f32 %v1184, %v1268
    %v1270 = vpop.f32.mrb[0].mxu0
    %1271 = vmatprep.mubr.f32.mxu0 0.0
    %1272 = vmatmul.mubr.f32.gmra.mrb[0].mxu0 %v1051
    %v1273 = vpop.f32.mrb[0].mxu0
    %v1274 = vadd.f32 %v1189, %v1273
    %v1275 = vpop.f32.mrb[0].mxu0
    %1276 = vmatprep.mubr.f32.mxu0 0.0
    %1277 = vmatmul.mubr.f32.gmra.mrb[0].mxu0 %v1054
    %v1278 = vpop.f32.mrb[0].mxu0
    %v1279 = vadd.f32 %v1194, %v1278
    %v1280 = vpop.f32.mrb[0].mxu0
    %1281 = vdwg.mxu0
    %v1282 = vmax.f32 %v1264, 0.0
    %v1283 = vmax.f32 %v1269, 0.0
    %v1284 = vmax.f32 %v1274, 0.0
    %v1285 = vmax.f32 %v1279, 0.0
    %v1286 = vld [vmem:[#allocation2 + $0x10] sm:$0xff]
    %v1287 = vld [vmem:[#allocation2 + $0x18] sm:$0xff]
    %v1288 = vld [vmem:[#allocation2 + $0x30] sm:$0xff]
    %v1289 = vld [vmem:[#allocation2 + $0x38] sm:$0xff]
    %s1290 = scalar_lea.vmem [#allocation11], 128
    %v1291 = vld [vmem:[%s1290] sm:$0xff]
    %v1292 = vld [vmem:[%s1290 + $0x8] sm:$0xff]
    %v1293 = vld [vmem:[%s1290 + $0x10] sm:$0xff]
    %v1294 = vld [vmem:[%s1290 + $0x18] sm:$0xff]
    %v1295 = vld [vmem:[%s1290 + $0x20] sm:$0xff]
    %v1296 = vld [vmem:[%s1290 + $0x28] sm:$0xff]
    %v1297 = vld [vmem:[%s1290 + $0x30] sm:$0xff]
    %v1298 = vld [vmem:[%s1290 + $0x38] sm:$0xff]
    %v1299 = vld [vmem:[%s1290 + $0x40] sm:$0xff]
    %v1300 = vld [vmem:[%s1290 + $0x48] sm:$0xff]
    %v1301 = vld [vmem:[%s1290 + $0x50] sm:$0xff]
    %v1302 = vld [vmem:[%s1290 + $0x58] sm:$0xff]
    %v1303 = vld [vmem:[%s1290 + $0x60] sm:$0xff]
    %v1304 = vld [vmem:[%s1290 + $0x68] sm:$0xff]
    %v1305 = vld [vmem:[%s1290 + $0x70] sm:$0xff]
    %v1306 = vld [vmem:[%s1290 + $0x78] sm:$0xff]
    %s1307 = scalar_lea.vmem %s6, 1
    %v1308 = vld [vmem:[%s1307] sm:$0x1]
    %v1310 = vlaneseq
    %v1311 = vshrl.u32 %v1310, 7
    %v1312 = vsub.s32 0, %v1311
    %v1313 = vrot.slane %v1308, %v1312
    %1315 = vmatprep.subr.mxu0 0.0
    %1316 = vmatpush1.msra.mxu0 %v1291
    %1317 = vmatprep.subr.mxu0 0.0
    %1318 = vmatpush1.msra.mxu0 %v1292
    %1319 = vmatprep.subr.mxu0 0.0
    %1320 = vmatpush1.msra.mxu0 %v1293
    %1321 = vmatprep.subr.mxu0 0.0
    %1322 = vmatpush1.msra.mxu0 %v1294
    %1323 = vmatprep.subr.mxu0 0.0
    %1324 = vmatpush1.msra.mxu0 %v1295
    %1325 = vmatprep.subr.mxu0 0.0
    %1326 = vmatpush1.msra.mxu0 %v1296
    %1327 = vmatprep.subr.mxu0 0.0
    %1328 = vmatpush1.msra.mxu0 %v1297
    %1329 = vmatprep.subr.mxu0 0.0
    %1330 = vmatpush1.msra.mxu0 %v1298
    %1331 = vmatprep.subr.mxu0 0.0
    %1332 = vmatpush1.msra.mxu0 %v1299
    %1333 = vmatprep.subr.mxu0 0.0
    %1334 = vmatpush1.msra.mxu0 %v1300
    %1335 = vmatprep.subr.mxu0 0.0
    %1336 = vmatpush1.msra.mxu0 %v1301
    %1337 = vmatprep.subr.mxu0 0.0
    %1338 = vmatpush1.msra.mxu0 %v1302
    %1339 = vmatprep.subr.mxu0 0.0
    %1340 = vmatpush1.msra.mxu0 %v1303
    %1341 = vmatprep.subr.mxu0 0.0
    %1342 = vmatpush1.msra.mxu0 %v1304
    %1343 = vmatprep.subr.mxu0 0.0
    %1344 = vmatpush1.msra.mxu0 %v1305
    %1345 = vmatprep.subr.mxu0 0.0
    %1346 = vmatpush1.msra.mxu0 %v1306
    %1347 = vmatprep.subr.mxu0 0.0
    %1348 = vmatpush1.msra.mxu0 0.0
    %1349 = vmatprep.subr.mxu0 0.0
    %1350 = vmatpush1.msra.mxu0 0.0
    %1351 = vmatprep.subr.mxu0 0.0
    %1352 = vmatpush1.msra.mxu0 0.0
    %1353 = vmatprep.subr.mxu0 0.0
    %1354 = vmatpush1.msra.mxu0 0.0
    %1355 = vmatprep.subr.mxu0 0.0
    %1356 = vmatpush1.msra.mxu0 0.0
    %1357 = vmatprep.subr.mxu0 0.0
    %1358 = vmatpush1.msra.mxu0 0.0
    %1359 = vmatprep.subr.mxu0 0.0
    %1360 = vmatpush1.msra.mxu0 0.0
    %1361 = vmatprep.subr.mxu0 0.0
    %1362 = vmatpush1.msra.mxu0 0.0
    %1363 = vmatprep.subr.mxu0 0.0
    %1364 = vmatpush1.msra.mxu0 0.0
    %1365 = vmatprep.subr.mxu0 0.0
    %1366 = vmatpush1.msra.mxu0 0.0
    %1367 = vmatprep.subr.mxu0 0.0
    %1368 = vmatpush1.msra.mxu0 0.0
    %1369 = vmatprep.subr.mxu0 0.0
    %1370 = vmatpush1.msra.mxu0 0.0
    %1371 = vmatprep.subr.mxu0 0.0
    %1372 = vmatpush1.msra.mxu0 0.0
    %1373 = vmatprep.subr.mxu0 0.0
    %1374 = vmatpush1.msra.mxu0 0.0
    %1375 = vmatprep.subr.mxu0 0.0
    %1376 = vmatpush1.msra.mxu0 0.0
    %1377 = vmatprep.subr.mxu0 0.0
    %1378 = vmatpush1.msra.mxu0 0.0
    %1379 = vmatprep.mubr.f32.mxu0 0.0
    %1380 = vmatmul.mubr.f32.gmra.mrb[0].mxu0 %v1286
    %v1381 = vpop.f32.mrb[0].mxu0
    %v1382 = vadd.f32 %v1313, %v1381
    %v1383 = vpop.f32.mrb[0].mxu0
    %1384 = vmatprep.mubr.f32.mxu0 0.0
    %1385 = vmatmul.mubr.f32.gmra.mrb[0].mxu0 %v1287
    %v1386 = vpop.f32.mrb[0].mxu0
    %v1387 = vadd.f32 %v1313, %v1386
    %v1388 = vpop.f32.mrb[0].mxu0
    %1389 = vmatprep.mubr.f32.mxu0 0.0
    %1390 = vmatmul.mubr.f32.gmra.mrb[0].mxu0 %v1288
    %v1391 = vpop.f32.mrb[0].mxu0
    %v1392 = vadd.f32 %v1313, %v1391
    %v1393 = vpop.f32.mrb[0].mxu0
    %1394 = vmatprep.mubr.f32.mxu0 0.0
    %1395 = vmatmul.mubr.f32.gmra.mrb[0].mxu0 %v1289
    %v1396 = vpop.f32.mrb[0].mxu0
    %v1397 = vadd.f32 %v1313, %v1396
    %v1398 = vpop.f32.mrb[0].mxu0
    %1399 = vdwg.mxu0
    %v1400 = vadd.f32 %v1282, %v1382
    %v1401 = vadd.f32 %v1283, %v1387
    %v1402 = vadd.f32 %v1284, %v1392
    %v1403 = vadd.f32 %v1285, %v1397
    %v1404 = vmax.f32 %v1400, 0.0
    %v1405 = vmax.f32 %v1401, 0.0
    %v1406 = vmax.f32 %v1402, 0.0
    %v1407 = vmax.f32 %v1403, 0.0
    %1408 = vst [vmem:[#allocation13] sm:$0xff] %v1404
    %1409 = vst [vmem:[#allocation13 + $0x8] sm:$0xff] %v1405
    %1410 = vst [vmem:[#allocation13 + $0x10] sm:$0xff] %v1406
    %1411 = vst [vmem:[#allocation13 + $0x18] sm:$0xff] %v1407
    // Predicated region
    $region46: #{tpu_custom_call.1} parent=1 // pred_check
      _
    $region47: #{tpu_custom_call.1} parent=1 // pred_check_branch
      %1413 = sbr.rel (0) target = $region49
    $region48: #{tpu_custom_call.1} parent=1 // pred_region
      %s1415 = ssub.s32 512, 512
      %1416 = vsyncadd [#allocation7], %s1415
      %s1417 = sshll.u32 [#allocation13], 4
      %s1418 = int_to_ptr.vmem [resolvable:$true] %s1417
      %1423 = dma.vmem_to_hbm [thread:$0]  %s1418, 512, %s7, [#allocation7], 128, 128, 8
    $region49: #{tpu_custom_call.1} parent=1 // pred_fallthru
      _
    // Predicated region
    $region50: #{tpu_custom_call.1} parent=1 // pred_check
      _
    $region51: #{tpu_custom_call.1} parent=1 // pred_check_branch
      %1425 = sbr.rel (0) target = $region53
    $region52: #{tpu_custom_call.1} parent=1 // pred_region
      %1426 = dma.done [#allocation7], 512
    $region53: #{tpu_custom_call.1} parent=1 // pred_fallthru
      _
    %1427 = vsyncpa [#allocation6], 1
    %1428 = vsyncpa [#allocation9], 1
    %1429 = vsyncpa [#allocation12], 1
    %1430 = vsyncpa [#allocation7], 1

</llo_original>
